<compile_context>
chip_gen: v6e
topology: v6e:2x2x1
jax: 0.10.0
libtpu: 0.0.40
codegen_flags: <defaults>
</compile_context>

<pallas_src>
import functools

import jax
import jax.numpy as jnp
import numpy as np
from jax.experimental import pallas as pl
from jax.experimental.pallas import tpu as pltpu


_MAX_TILE_N = 2048   # row-tile plateau (~85% of HBM roofline)
_SMALL_K = 8         # D_in at or below this -> VPU broadcast-MAC first layer


def _round_up(x, m):
    return ((x + m - 1) // m) * m


def _pad2(a, rows, cols):
    pr, pc = rows - a.shape[0], cols - a.shape[1]
    if pr or pc:
        a = jnp.pad(a, ((0, pr), (0, pc)))
    return a


def _vmem_params():
    """(buffer_budget_bytes, vmem_limit_bytes) derived from the local chip."""
    cap = None
    try:
        info = pltpu.get_tpu_info()
        cap = int(getattr(info, "vmem_capacity_bytes", 0)) or None
    except Exception:
        cap = None
    if cap is None:
        cap = 64 * 1024 * 1024            # conservative: v7x per-TC VMEM
    limit = min((cap * 3) // 4, 64 * 1024 * 1024)   # 48 MiB on v7x, 64 MiB on v5e/v6e
    budget = (limit * 3) // 4
    return int(budget), int(limit)


def _choose_tile_n(n_rows, per_row_bytes, fixed_bytes, budget_bytes):
    avail = max(budget_bytes - fixed_bytes, per_row_bytes * 8)
    t = avail // max(per_row_bytes, 1)
    t = int(min(t, _MAX_TILE_N, _round_up(n_rows, 8)))
    # keep >= ~8 grid steps when rows allow (megacore load balance on v7x)
    if n_rows >= 8 * 256:
        t = min(t, _round_up(-(-n_rows // 8), 256))
    if t >= 512:
        t = (t // 256) * 256              # MXU M-granule alignment
    else:
        t = max(8, (t // 8) * 8)
    return t


# ----------------------------- single layer ---------------------------------

def _make_layer_kernel(d_in, d_out, omega_0, small_k, compute_dtype):
    def kernel(x_ref, w_ref, b_ref, o_ref):
        x = x_ref[...].astype(jnp.float32)
        w = w_ref[...]
        b = b_ref[...]
        if small_k:
            # VPU broadcast-MAC over the tiny (unpadded) K — no MXU pass.
            y = jnp.zeros((x.shape[0], w.shape[1]), jnp.float32)
            for k in range(d_in):
                y = y + x[:, k:k + 1] * w[k:k + 1, :]
            y = y + b
        else:
            kp = w.shape[0]
            if d_in != kp:  # zero-extend K inside the kernel (x never padded in HBM)
                x = jnp.concatenate(
                    [x, jnp.zeros((x.shape[0], kp - d_in), x.dtype)], axis=1)
            y = jnp.dot(x.astype(compute_dtype), w,
                        preferred_element_type=jnp.float32) + b
        t = omega_0 * y                       # omega*(|y|+1)*y == t*|y| + t
        out = jnp.sin(t * jnp.abs(y) + t)
        if out.shape[1] != d_out:
            out = out[:, :d_out]
        o_ref[...] = out.astype(o_ref.dtype)
    return kernel


def finer_layer(x, w_t, b=None, *, omega_0=30.0, tile_n=None,
                mxu_dtype=jnp.bfloat16):
    """FINER layer forward.

    x: (N, D_in); w_t: (D_in, D_out) == W^T of nn.Linear; b: (D_out,) or None.
    mxu_dtype: MXU operand dtype (default bf16; jnp.float32 = parity mode).
    Accumulation, bias add and the abs/sin epilogue always stay float32.
    """
    N, D_in = x.shape
    assert w_t.shape[0] == D_in
    D_out = w_t.shape[1]
    out_dtype = x.dtype
    if b is None:
        b = jnp.zeros((D_out,), jnp.float32)

    small_k = D_in <= _SMALL_K
    compute_dtype = jnp.dtype(jnp.float32 if small_k else mxu_dtype)
    is_bf16 = compute_dtype == jnp.dtype(jnp.bfloat16)

    d_out_pad = _round_up(D_out, 128)                 # MXU/VPU-friendly N for weight
    if small_k:
        k_pad = D_in                                  # keep true K; VPU path
        w_store = jnp.float32
    else:
        k_pad = _round_up(D_in, 16 if is_bf16 else 8)  # sublane/packing aligned
        w_store = compute_dtype

    wp = _pad2(w_t.astype(jnp.float32), k_pad, d_out_pad).astype(w_store)
    bp = _pad2(b.astype(jnp.float32).reshape(1, -1), 1, d_out_pad)

    budget, vmem_limit = _vmem_params()
    xb = jnp.dtype(x.dtype).itemsize
    ob = jnp.dtype(out_dtype).itemsize
    fixed = 2 * (k_pad * d_out_pad * jnp.dtype(w_store).itemsize + d_out_pad * 4)
    per_row = 2 * D_in * xb + 2 * D_out * ob + 6 * d_out_pad * 4
    if tile_n is None:
        tile_n = _choose_tile_n(N, per_row, fixed, budget)
    tile_n = max(8, _round_up(int(tile_n), 8))

    kernel = _make_layer_kernel(D_in, D_out, float(omega_0), small_k, compute_dtype)
    out = pl.pallas_call(
        kernel,
        out_shape=jax.ShapeDtypeStruct((N, D_out), out_dtype),
        grid_spec=pl.GridSpec(
            grid=(pl.cdiv(N, tile_n),),
            in_specs=[
                pl.BlockSpec((tile_n, D_in), lambda i: (i, 0)),     # x: true width
                pl.BlockSpec((k_pad, d_out_pad), lambda i: (0, 0)),  # resident W
                pl.BlockSpec((1, d_out_pad), lambda i: (0, 0)),      # resident b
            ],
            out_specs=pl.BlockSpec((tile_n, D_out), lambda i: (i, 0)),
        ),
        compiler_params=pltpu.CompilerParams(
            dimension_semantics=("parallel",),
            vmem_limit_bytes=vmem_limit,
        ),
    )(x, wp, bp)
    return out


# ------------------------- fused multi-layer MLP ----------------------------

def _make_mlp_kernel(num_layers, d_in, d_out_final, omegas, small_k, compute_dtype):
    def kernel(*refs):
        x_ref = refs[0]
        o_ref = refs[-1]
        w_refs = refs[1:1 + num_layers]
        b_refs = refs[1 + num_layers:1 + 2 * num_layers]

        h = x_ref[...].astype(jnp.float32)
        for l in range(num_layers):                    # static unroll over layers
            w = w_refs[l][...]
            b = b_refs[l][...]
            if l == 0 and small_k:
                y = jnp.zeros((h.shape[0], w.shape[1]), jnp.float32)
                for k in range(d_in):
                    y = y + h[:, k:k + 1] * w[k:k + 1, :]
                y = y + b
            else:
                xk = h
                kp = w.shape[0]
                if xk.shape[1] != kp:                  # only possible for layer 0
                    xk = jnp.concatenate(
                        [xk, jnp.zeros((xk.shape[0], kp - xk.shape[1]), xk.dtype)],
                        axis=1)
                y = jnp.dot(xk.astype(compute_dtype), w,
                            preferred_element_type=jnp.float32) + b
            t = omegas[l] * y
            h = jnp.sin(t * jnp.abs(y) + t)            # f32 activation stays on-chip
        if h.shape[1] != d_out_final:
            h = h[:, :d_out_final]
        o_ref[...] = h.astype(o_ref.dtype)
    return kernel


def finer_mlp(x, weights, biases, *, omega_0=30.0, tile_n=None,
              mxu_dtype=jnp.bfloat16):
    """Fused stack of FinerLayers: all layer weights stay resident in VMEM.

    weights: list of (d_in_l, d_out_l) arrays (W^T per layer), chained so that
             d_out_{l-1} == d_in_l.  biases: list of (d_out_l,) arrays or None.
    omega_0: scalar or per-layer sequence.
    """
    N, D_in = x.shape
    L = len(weights)
    assert L >= 1 and len(biases) == L
    assert weights[0].shape[0] == D_in
    for l in range(1, L):
        assert weights[l].shape[0] == weights[l - 1].shape[1]
    dims = [D_in] + [w.shape[1] for w in weights]
    D_out = dims[-1]
    out_dtype = x.dtype

    if isinstance(omega_0, (tuple, list)):
        omegas = tuple(float(o) for o in omega_0)
        assert len(omegas) == L
    else:
        omegas = (float(omega_0),) * L

    small_k = D_in <= _SMALL_K
    compute_dtype = jnp.dtype(mxu_dtype)
    is_bf16 = compute_dtype == jnp.dtype(jnp.bfloat16)

    # Per-layer padded widths (only the weights are padded; x / out stay exact).
    p = [0] * (L + 1)
    p[0] = D_in if small_k else _round_up(D_in, 16 if is_bf16 else 8)
    for l in range(1, L + 1):
        p[l] = _round_up(dims[l], 128)

    w_arrs, b_arrs = [], []
    for l in range(L):
        w_store = jnp.float32 if (l == 0 and small_k) else compute_dtype
        w_arrs.append(_pad2(weights[l].astype(jnp.float32), p[l], p[l + 1]).astype(w_store))
        b_l = biases[l]
        if b_l is None:
            b_l = jnp.zeros((dims[l + 1],), jnp.float32)
        b_arrs.append(_pad2(b_l.astype(jnp.float32).reshape(1, -1), 1, p[l + 1]))

    budget, vmem_limit = _vmem_params()
    xb = jnp.dtype(x.dtype).itemsize
    ob = jnp.dtype(out_dtype).itemsize
    fixed = 2 * sum(w.size * w.dtype.itemsize for w in w_arrs)
    fixed += 2 * sum(b.size * 4 for b in b_arrs)
    max_p = max(p[1:])
    per_row = 2 * D_in * xb + 2 * D_out * ob + 6 * max_p * 4
    if tile_n is None:
        tile_n = _choose_tile_n(N, per_row, fixed, budget)
    tile_n = max(8, _round_up(int(tile_n), 8))

    in_specs = [pl.BlockSpec((tile_n, D_in), lambda i: (i, 0))]
    in_specs += [pl.BlockSpec(w_arrs[l].shape, lambda i: (0, 0)) for l in range(L)]
    in_specs += [pl.BlockSpec(b_arrs[l].shape, lambda i: (0, 0)) for l in range(L)]

    kernel = _make_mlp_kernel(L, D_in, D_out, omegas, small_k, compute_dtype)
    out = pl.pallas_call(
        kernel,
        out_shape=jax.ShapeDtypeStruct((N, D_out), out_dtype),
        grid_spec=pl.GridSpec(
            grid=(pl.cdiv(N, tile_n),),
            in_specs=in_specs,
            out_specs=pl.BlockSpec((tile_n, D_out), lambda i: (i, 0)),
        ),
        compiler_params=pltpu.CompilerParams(
            dimension_semantics=("parallel",),
            vmem_limit_bytes=vmem_limit,
        ),
    )(x, *w_arrs, *b_arrs)
    return out


# ------------------------------ init helper ---------------------------------

def init_finer_params(key, in_features, out_features, *, is_first=False,
                      omega_0=30.0, first_bias_scale=None):
    """FINER-style init (mirrors FinerLayer.init_weights / init_first_bias)."""
    kw, kb = jax.random.split(key)
    if is_first:
        bound_w = 1.0 / in_features
    else:
        bound_w = np.sqrt(6.0 / in_features) / omega_0
    # Stored as (in_features, out_features) == W^T relative to nn.Linear.
    w_t = jax.random.uniform(kw, (in_features, out_features), jnp.float32,
                             minval=-bound_w, maxval=bound_w)
    if is_first and first_bias_scale is not None:
        bound_b = first_bias_scale
    else:
        bound_b = 1.0 / np.sqrt(in_features)
    b = jax.random.uniform(kb, (out_features,), jnp.float32,
                           minval=-bound_b, maxval=bound_b)
    return w_t, b


if __name__ == "__main__":
    key = jax.random.PRNGKey(0)
    k_coords, k_x, k_p0, k_p1, k_p2 = jax.random.split(key, 5)
    omega_0 = 30.0
    N = 200

    # ---- 1) first layer, tiny D_in (coords) -> f32 VPU broadcast-MAC path ----
    D_in0, D_out0 = 2, 32
    coords = jax.random.uniform(k_coords, (N, D_in0), jnp.float32, minval=-1.0, maxval=1.0)
    w0, b0 = init_finer_params(k_p0, D_in0, D_out0, is_first=True,
                               omega_0=omega_0, first_bias_scale=0.05)
    out0 = jax.block_until_ready(finer_layer(coords, w0, b0, omega_0=omega_0))
    y0 = coords @ w0 + b0
    ref0 = jnp.sin(omega_0 * (jnp.abs(y0) + 1.0) * y0)
    np.testing.assert_allclose(np.asarray(out0), np.asarray(ref0), rtol=2e-4, atol=2e-4)

    # ---- 2) hidden layer: bf16 MXU operands, f32 accumulation + epilogue ----
    D_in1, D_out1 = 32, 48
    xh = jax.random.normal(k_x, (N, D_in1), jnp.float32)
    w1, b1 = init_finer_params(k_p1, D_in1, D_out1, omega_0=omega_0)
    out1 = jax.block_until_ready(finer_layer(xh, w1, b1, omega_0=omega_0))
    x16 = xh.astype(jnp.bfloat16).astype(jnp.float32)
    w16 = w1.astype(jnp.bfloat16).astype(jnp.float32)
    y1 = x16 @ w16 + b1
    ref1 = jnp.sin(omega_0 * (jnp.abs(y1) + 1.0) * y1)
    np.testing.assert_allclose(np.asarray(out1), np.asarray(ref1), rtol=3e-3, atol=3e-3)

    # ---- 3) fused 3-layer FINER MLP (coords -> hidden -> hidden -> hidden) ----
    hidden = 32
    wa, ba = init_finer_params(k_p0, D_in0, hidden, is_first=True,
                               omega_0=omega_0, first_bias_scale=0.05)
    wb, bb = init_finer_params(k_p1, hidden, hidden, omega_0=omega_0)
    wc, bc = init_finer_params(k_p2, hidden, hidden, omega_0=omega_0)
    out_mlp = jax.block_until_ready(
        finer_mlp(coords, [wa, wb, wc], [ba, bb, bc], omega_0=omega_0))

    # Reference mimicking the kernel's dtype choices (layer 0 f32 MAC, layers
    # >=1 bf16 MXU operands with f32 accumulation and f32 epilogue).
    h_ref = coords
    for li, (w_l, b_l) in enumerate(((wa, ba), (wb, bb), (wc, bc))):
        if li == 0:
            y_l = h_ref @ w_l + b_l
        else:
            y_l = (h_ref.astype(jnp.bfloat16).astype(jnp.float32)
                   @ w_l.astype(jnp.bfloat16).astype(jnp.float32)) + b_l
        h_ref = jnp.sin(omega_0 * (jnp.abs(y_l) + 1.0) * y_l)
    np.testing.assert_allclose(np.asarray(out_mlp), np.asarray(h_ref),
                               rtol=1e-2, atol=1e-2)

    print("KERNEL_OK")
</pallas_src>

<mosaic_0001>
module attributes {stable_mosaic.version = 11 : i64} {
  func.func @kernel(%arg0: i32, %arg1: memref<200x2xf32, #tpu.memory_space<vmem>>, %arg2: memref<2x128xf32, #tpu.memory_space<vmem>>, %arg3: memref<1x128xf32, #tpu.memory_space<vmem>>, %arg4: memref<200x32xf32, #tpu.memory_space<vmem>>) attributes {dimension_semantics = [#tpu.dimension_semantics<parallel>], iteration_bounds = array<i64: 1>, scalar_prefetch = 0 : i64, scratch_operands = 0 : i64, tpu.core_type = #tpu.core_type<tc>, window_params = [{transform_indices = @transform_0, window_bounds = array<i64: 200, 2>}, {pipeline_mode = #tpu.pipeline_mode<synchronous>, transform_indices = @transform_1, window_bounds = array<i64: 2, 128>}, {pipeline_mode = #tpu.pipeline_mode<synchronous>, transform_indices = @transform_2, window_bounds = array<i64: 1, 128>}, {transform_indices = @transform_3, window_bounds = array<i64: 200, 32>}]} {
    %c0 = arith.constant 0 : index
    %c0_0 = arith.constant 0 : index
    %0 = vector.load %arg1[%c0, %c0_0] : memref<200x2xf32, #tpu.memory_space<vmem>>, vector<200x2xf32>
    %c0_1 = arith.constant 0 : index
    %c0_2 = arith.constant 0 : index
    %1 = vector.load %arg2[%c0_1, %c0_2] : memref<2x128xf32, #tpu.memory_space<vmem>>, vector<2x128xf32>
    %c0_3 = arith.constant 0 : index
    %c0_4 = arith.constant 0 : index
    %2 = vector.load %arg3[%c0_3, %c0_4] : memref<1x128xf32, #tpu.memory_space<vmem>>, vector<1x128xf32>
    %cst = arith.constant 0.000000e+00 : f32
    %3 = vector.broadcast %cst : f32 to vector<200x128xf32>
    %4 = vector.extract_strided_slice %0 {offsets = [0, 0], sizes = [200, 1], strides = [1, 1]} : vector<200x2xf32> to vector<200x1xf32>
    %5 = vector.extract_strided_slice %1 {offsets = [0, 0], sizes = [1, 128], strides = [1, 1]} : vector<2x128xf32> to vector<1x128xf32>
    %6 = vector.broadcast %4 : vector<200x1xf32> to vector<200x128xf32>
    %7 = vector.broadcast %5 : vector<1x128xf32> to vector<200x128xf32>
    %8 = arith.mulf %6, %7 : vector<200x128xf32>
    %9 = arith.addf %3, %8 : vector<200x128xf32>
    %10 = vector.extract_strided_slice %0 {offsets = [0, 1], sizes = [200, 1], strides = [1, 1]} : vector<200x2xf32> to vector<200x1xf32>
    %11 = vector.extract_strided_slice %1 {offsets = [1, 0], sizes = [1, 128], strides = [1, 1]} : vector<2x128xf32> to vector<1x128xf32>
    %12 = vector.broadcast %10 : vector<200x1xf32> to vector<200x128xf32>
    %13 = vector.broadcast %11 : vector<1x128xf32> to vector<200x128xf32>
    %14 = arith.mulf %12, %13 : vector<200x128xf32>
    %15 = arith.addf %9, %14 : vector<200x128xf32>
    %16 = vector.broadcast %2 : vector<1x128xf32> to vector<200x128xf32>
    %17 = arith.addf %15, %16 : vector<200x128xf32>
    %cst_5 = arith.constant 3.000000e+01 : f32
    %18 = vector.broadcast %cst_5 : f32 to vector<200x128xf32>
    %19 = arith.mulf %18, %17 : vector<200x128xf32>
    %20 = math.absf %17 : vector<200x128xf32>
    %21 = arith.mulf %19, %20 : vector<200x128xf32>
    %22 = arith.addf %21, %19 : vector<200x128xf32>
    %23 = math.sin %22 : vector<200x128xf32>
    %24 = vector.extract_strided_slice %23 {offsets = [0, 0], sizes = [200, 32], strides = [1, 1]} : vector<200x128xf32> to vector<200x32xf32>
    %c0_6 = arith.constant 0 : index
    %c0_7 = arith.constant 0 : index
    %25 = vector.load %arg4[%c0_6, %c0_7] : memref<200x32xf32, #tpu.memory_space<vmem>>, vector<200x32xf32>
    tpu.vector_store %arg4[%c0_6, %c0_7], %24 {strides = array<i32>} : memref<200x32xf32, #tpu.memory_space<vmem>>, vector<200x32xf32>,
    return
  }
  func.func @transform_0(%arg0: i32) -> (i32, i32) {
    %c0_i32 = arith.constant 0 : i32
    %c0_i32_0 = arith.constant 0 : i32
    return %arg0, %c0_i32 : i32, i32
  }
  func.func @transform_1(%arg0: i32) -> (i32, i32) {
    %c0_i32 = arith.constant 0 : i32
    %c0_i32_0 = arith.constant 0 : i32
    %c0_i32_1 = arith.constant 0 : i32
    return %c0_i32, %c0_i32_0 : i32, i32
  }
  func.func @transform_2(%arg0: i32) -> (i32, i32) {
    %c0_i32 = arith.constant 0 : i32
    %c0_i32_0 = arith.constant 0 : i32
    %c0_i32_1 = arith.constant 0 : i32
    return %c0_i32, %c0_i32_0 : i32, i32
  }
  func.func @transform_3(%arg0: i32) -> (i32, i32) {
    %c0_i32 = arith.constant 0 : i32
    %c0_i32_0 = arith.constant 0 : i32
    return %arg0, %c0_i32 : i32, i32
  }
}

</mosaic_0001>

<llo_original>
// kernel: tpu_custom_call.1
$region0: #{tpu_custom_call.1}
  #allocation0 [shape = 'u32[]', space=smem, size = 0x4, offset = 0x4, fixed_abs, tag = 'smem constant byte address 0x4 - core index']
  #allocation1 [shape = 'u32[144,128]{1,0:T(1,128)}', space=vmem, size = 0x12000, scoped, tag = 'internal scratch']
  %s0 = inlined_call_operand.vmem [shape: f32[200,2], index: 0, kind: input, shape index: {}]
  %s1 = inlined_call_operand.vmem [shape: f32[2,128], index: 1, kind: input, shape index: {}]
  %s2 = inlined_call_operand.vmem [shape: f32[1,128], index: 2, kind: input, shape index: {}]
  %s3 = inlined_call_operand.vmem [shape: f32[200,32], index: 3, kind: output, shape index: {}]
  %s4 = sld [smem:[#allocation0]]
  $region22: #{tpu_custom_call.1} parent=0
    _
  %s6 = ssub.s32 1, %s4
  %s7 = scalar_select 0, %s6, %s4
  // Predicated region
  $region2: #{tpu_custom_call.1} parent=0 // pred_check
    _
  $region3: #{tpu_custom_call.1} parent=0 // pred_check_branch
    %9 = sbr.rel (0) target = $region5
  $region4: #{tpu_custom_call.1} parent=0 // pred_region
    _
  $region5: #{tpu_custom_call.1} parent=0 // pred_fallthru
    _
  // Predicated region
  $region6: #{tpu_custom_call.1} parent=0 // pred_check
    _
  $region7: #{tpu_custom_call.1} parent=0 // pred_check_branch
    %11 = sbr.rel (0) target = $region9
  $region8: #{tpu_custom_call.1} parent=0 // pred_region
    _
  $region9: #{tpu_custom_call.1} parent=0 // pred_fallthru
    _
  // Predicated region
  $region10: #{tpu_custom_call.1} parent=0 // pred_check
    _
  $region11: #{tpu_custom_call.1} parent=0 // pred_check_branch
    %13 = sbr.rel (0) target = $region13
  $region12: #{tpu_custom_call.1} parent=0 // pred_region
    _
  $region13: #{tpu_custom_call.1} parent=0 // pred_fallthru
    _
  %v14 = vld [vmem:[%s0] sm:$0xff]
  %v15 = vld [vmem:[%s0 + $0x8] sm:$0xff]
  %v16 = vld [vmem:[%s0 + $0x10] sm:$0xff]
  %v17 = vld [vmem:[%s0 + $0x18] sm:$0xff]
  %v18 = vld [vmem:[%s0 + $0x20] sm:$0xff]
  %v19 = vld [vmem:[%s0 + $0x28] sm:$0xff]
  %v20 = vld [vmem:[%s0 + $0x30] sm:$0xff]
  %v21 = vld [vmem:[%s0 + $0x38] sm:$0xff]
  %v22 = vld [vmem:[%s0 + $0x40] sm:$0xff]
  %v23 = vld [vmem:[%s0 + $0x48] sm:$0xff]
  %v24 = vld [vmem:[%s0 + $0x50] sm:$0xff]
  %v25 = vld [vmem:[%s0 + $0x58] sm:$0xff]
  %v26 = vld [vmem:[%s0 + $0x60] sm:$0xff]
  %v27 = vld [vmem:[%s0 + $0x68] sm:$0xff]
  %v28 = vld [vmem:[%s0 + $0x70] sm:$0xff]
  %v29 = vld [vmem:[%s0 + $0x78] sm:$0xff]
  %v30 = vld [vmem:[%s0 + $0x80] sm:$0xff]
  %v31 = vld [vmem:[%s0 + $0x88] sm:$0xff]
  %v32 = vld [vmem:[%s0 + $0x90] sm:$0xff]
  %v33 = vld [vmem:[%s0 + $0x98] sm:$0xff]
  %v34 = vld [vmem:[%s0 + $0xa0] sm:$0xff]
  %v35 = vld [vmem:[%s0 + $0xa8] sm:$0xff]
  %v36 = vld [vmem:[%s0 + $0xb0] sm:$0xff]
  %v37 = vld [vmem:[%s0 + $0xb8] sm:$0xff]
  %v38 = vld [vmem:[%s0 + $0xc0] sm:$0xff]
  %v39 = vld [vmem:[%s1] sm:$0x3]
  %v40 = vld [vmem:[%s2] sm:$0x1]
  %42 = vset.pattern.permute.xlu0 0
  %43 = vperm.xlu0 %42, %v14
  %v44 = vpop.permute.xlu0 %43
  %47 = vset.pattern.permute.xlu0 0
  %48 = vperm.xlu0 %47, %v15
  %v49 = vpop.permute.xlu0 %48
  %52 = vset.pattern.permute.xlu0 0
  %53 = vperm.xlu0 %52, %v16
  %v54 = vpop.permute.xlu0 %53
  %57 = vset.pattern.permute.xlu0 0
  %58 = vperm.xlu0 %57, %v17
  %v59 = vpop.permute.xlu0 %58
  %62 = vset.pattern.permute.xlu0 0
  %63 = vperm.xlu0 %62, %v18
  %v64 = vpop.permute.xlu0 %63
  %67 = vset.pattern.permute.xlu0 0
  %68 = vperm.xlu0 %67, %v19
  %v69 = vpop.permute.xlu0 %68
  %72 = vset.pattern.permute.xlu0 0
  %73 = vperm.xlu0 %72, %v20
  %v74 = vpop.permute.xlu0 %73
  %77 = vset.pattern.permute.xlu0 0
  %78 = vperm.xlu0 %77, %v21
  %v79 = vpop.permute.xlu0 %78
  %82 = vset.pattern.permute.xlu0 0
  %83 = vperm.xlu0 %82, %v22
  %v84 = vpop.permute.xlu0 %83
  %87 = vset.pattern.permute.xlu0 0
  %88 = vperm.xlu0 %87, %v23
  %v89 = vpop.permute.xlu0 %88
  %92 = vset.pattern.permute.xlu0 0
  %93 = vperm.xlu0 %92, %v24
  %v94 = vpop.permute.xlu0 %93
  %97 = vset.pattern.permute.xlu0 0
  %98 = vperm.xlu0 %97, %v25
  %v99 = vpop.permute.xlu0 %98
  %102 = vset.pattern.permute.xlu0 0
  %103 = vperm.xlu0 %102, %v26
  %v104 = vpop.permute.xlu0 %103
  %107 = vset.pattern.permute.xlu0 0
  %108 = vperm.xlu0 %107, %v27
  %v109 = vpop.permute.xlu0 %108
  %112 = vset.pattern.permute.xlu0 0
  %113 = vperm.xlu0 %112, %v28
  %v114 = vpop.permute.xlu0 %113
  %117 = vset.pattern.permute.xlu0 0
  %118 = vperm.xlu0 %117, %v29
  %v119 = vpop.permute.xlu0 %118
  %122 = vset.pattern.permute.xlu0 0
  %123 = vperm.xlu0 %122, %v30
  %v124 = vpop.permute.xlu0 %123
  %127 = vset.pattern.permute.xlu0 0
  %128 = vperm.xlu0 %127, %v31
  %v129 = vpop.permute.xlu0 %128
  %132 = vset.pattern.permute.xlu0 0
  %133 = vperm.xlu0 %132, %v32
  %v134 = vpop.permute.xlu0 %133
  %137 = vset.pattern.permute.xlu0 0
  %138 = vperm.xlu0 %137, %v33
  %v139 = vpop.permute.xlu0 %138
  %142 = vset.pattern.permute.xlu0 0
  %143 = vperm.xlu0 %142, %v34
  %v144 = vpop.permute.xlu0 %143
  %147 = vset.pattern.permute.xlu0 0
  %148 = vperm.xlu0 %147, %v35
  %v149 = vpop.permute.xlu0 %148
  %152 = vset.pattern.permute.xlu0 0
  %153 = vperm.xlu0 %152, %v36
  %v154 = vpop.permute.xlu0 %153
  %157 = vset.pattern.permute.xlu0 0
  %158 = vperm.xlu0 %157, %v37
  %v159 = vpop.permute.xlu0 %158
  %162 = vset.pattern.permute.xlu0 0
  %163 = vperm.xlu0 %162, %v38
  %v164 = vpop.permute.xlu0 %163
  %v166 = vlaneseq
  %v167 = vshrl.u32 %v166, 7
  %v168 = vsub.s32 0, %v167
  %v169 = vrot.slane %v39, %v168
  %v170 = vmul.f32 %v44, %v169
  %v171 = vmul.f32 %v49, %v169
  %v172 = vmul.f32 %v54, %v169
  %v173 = vmul.f32 %v59, %v169
  %v174 = vmul.f32 %v64, %v169
  %v175 = vmul.f32 %v69, %v169
  %v176 = vmul.f32 %v74, %v169
  %v177 = vmul.f32 %v79, %v169
  %v178 = vmul.f32 %v84, %v169
  %v179 = vmul.f32 %v89, %v169
  %v180 = vmul.f32 %v94, %v169
  %v181 = vmul.f32 %v99, %v169
  %v182 = vmul.f32 %v104, %v169
  %v183 = vmul.f32 %v109, %v169
  %v184 = vmul.f32 %v114, %v169
  %v185 = vmul.f32 %v119, %v169
  %v186 = vmul.f32 %v124, %v169
  %v187 = vmul.f32 %v129, %v169
  %v188 = vmul.f32 %v134, %v169
  %v189 = vmul.f32 %v139, %v169
  %v190 = vmul.f32 %v144, %v169
  %v191 = vmul.f32 %v149, %v169
  %v192 = vmul.f32 %v154, %v169
  %v193 = vmul.f32 %v159, %v169
  %v194 = vmul.f32 %v164, %v169
  %v195 = vadd.f32 %v170, 0.0
  %v196 = vadd.f32 %v171, 0.0
  %v197 = vadd.f32 %v172, 0.0
  %v198 = vadd.f32 %v173, 0.0
  %v199 = vadd.f32 %v174, 0.0
  %v200 = vadd.f32 %v175, 0.0
  %v201 = vadd.f32 %v176, 0.0
  %v202 = vadd.f32 %v177, 0.0
  %v203 = vadd.f32 %v178, 0.0
  %v204 = vadd.f32 %v179, 0.0
  %v205 = vadd.f32 %v180, 0.0
  %v206 = vadd.f32 %v181, 0.0
  %v207 = vadd.f32 %v182, 0.0
  %v208 = vadd.f32 %v183, 0.0
  %v209 = vadd.f32 %v184, 0.0
  %v210 = vadd.f32 %v185, 0.0
  %v211 = vadd.f32 %v186, 0.0
  %v212 = vadd.f32 %v187, 0.0
  %v213 = vadd.f32 %v188, 0.0
  %v214 = vadd.f32 %v189, 0.0
  %v215 = vadd.f32 %v190, 0.0
  %v216 = vadd.f32 %v191, 0.0
  %v217 = vadd.f32 %v192, 0.0
  %v218 = vadd.f32 %v193, 0.0
  %v219 = vadd.f32 %v194, 0.0
  %220 = vset.pattern.permute.xlu0 1
  %221 = vperm.xlu0 %220, %v14
  %v222 = vpop.permute.xlu0 %221
  %224 = vset.pattern.permute.xlu0 1
  %225 = vperm.xlu0 %224, %v15
  %v226 = vpop.permute.xlu0 %225
  %228 = vset.pattern.permute.xlu0 1
  %229 = vperm.xlu0 %228, %v16
  %v230 = vpop.permute.xlu0 %229
  %232 = vset.pattern.permute.xlu0 1
  %233 = vperm.xlu0 %232, %v17
  %v234 = vpop.permute.xlu0 %233
  %236 = vset.pattern.permute.xlu0 1
  %237 = vperm.xlu0 %236, %v18
  %v238 = vpop.permute.xlu0 %237
  %240 = vset.pattern.permute.xlu0 1
  %241 = vperm.xlu0 %240, %v19
  %v242 = vpop.permute.xlu0 %241
  %244 = vset.pattern.permute.xlu0 1
  %245 = vperm.xlu0 %244, %v20
  %v246 = vpop.permute.xlu0 %245
  %248 = vset.pattern.permute.xlu0 1
  %249 = vperm.xlu0 %248, %v21
  %v250 = vpop.permute.xlu0 %249
  %252 = vset.pattern.permute.xlu0 1
  %253 = vperm.xlu0 %252, %v22
  %v254 = vpop.permute.xlu0 %253
  %256 = vset.pattern.permute.xlu0 1
  %257 = vperm.xlu0 %256, %v23
  %v258 = vpop.permute.xlu0 %257
  %260 = vset.pattern.permute.xlu0 1
  %261 = vperm.xlu0 %260, %v24
  %v262 = vpop.permute.xlu0 %261
  %264 = vset.pattern.permute.xlu0 1
  %265 = vperm.xlu0 %264, %v25
  %v266 = vpop.permute.xlu0 %265
  %268 = vset.pattern.permute.xlu0 1
  %269 = vperm.xlu0 %268, %v26
  %v270 = vpop.permute.xlu0 %269
  %272 = vset.pattern.permute.xlu0 1
  %273 = vperm.xlu0 %272, %v27
  %v274 = vpop.permute.xlu0 %273
  %276 = vset.pattern.permute.xlu0 1
  %277 = vperm.xlu0 %276, %v28
  %v278 = vpop.permute.xlu0 %277
  %280 = vset.pattern.permute.xlu0 1
  %281 = vperm.xlu0 %280, %v29
  %v282 = vpop.permute.xlu0 %281
  %284 = vset.pattern.permute.xlu0 1
  %285 = vperm.xlu0 %284, %v30
  %v286 = vpop.permute.xlu0 %285
  %288 = vset.pattern.permute.xlu0 1
  %289 = vperm.xlu0 %288, %v31
  %v290 = vpop.permute.xlu0 %289
  %292 = vset.pattern.permute.xlu0 1
  %293 = vperm.xlu0 %292, %v32
  %v294 = vpop.permute.xlu0 %293
  %296 = vset.pattern.permute.xlu0 1
  %297 = vperm.xlu0 %296, %v33
  %v298 = vpop.permute.xlu0 %297
  %300 = vset.pattern.permute.xlu0 1
  %301 = vperm.xlu0 %300, %v34
  %v302 = vpop.permute.xlu0 %301
  %304 = vset.pattern.permute.xlu0 1
  %305 = vperm.xlu0 %304, %v35
  %v306 = vpop.permute.xlu0 %305
  %308 = vset.pattern.permute.xlu0 1
  %309 = vperm.xlu0 %308, %v36
  %v310 = vpop.permute.xlu0 %309
  %312 = vset.pattern.permute.xlu0 1
  %313 = vperm.xlu0 %312, %v37
  %v314 = vpop.permute.xlu0 %313
  %316 = vset.pattern.permute.xlu0 1
  %317 = vperm.xlu0 %316, %v38
  %v318 = vpop.permute.xlu0 %317
  %v320 = vlaneseq
  %v321 = vshrl.u32 %v320, 7
  %v322 = vsub.s32 1, %v321
  %v323 = vrot.slane %v39, %v322
  %v324 = vmul.f32 %v222, %v323
  %v325 = vmul.f32 %v226, %v323
  %v326 = vmul.f32 %v230, %v323
  %v327 = vmul.f32 %v234, %v323
  %v328 = vmul.f32 %v238, %v323
  %v329 = vmul.f32 %v242, %v323
  %v330 = vmul.f32 %v246, %v323
  %v331 = vmul.f32 %v250, %v323
  %v332 = vmul.f32 %v254, %v323
  %v333 = vmul.f32 %v258, %v323
  %v334 = vmul.f32 %v262, %v323
  %v335 = vmul.f32 %v266, %v323
  %v336 = vmul.f32 %v270, %v323
  %v337 = vmul.f32 %v274, %v323
  %v338 = vmul.f32 %v278, %v323
  %v339 = vmul.f32 %v282, %v323
  %v340 = vmul.f32 %v286, %v323
  %v341 = vmul.f32 %v290, %v323
  %v342 = vmul.f32 %v294, %v323
  %v343 = vmul.f32 %v298, %v323
  %v344 = vmul.f32 %v302, %v323
  %v345 = vmul.f32 %v306, %v323
  %v346 = vmul.f32 %v310, %v323
  %v347 = vmul.f32 %v314, %v323
  %v348 = vmul.f32 %v318, %v323
  %v349 = vadd.f32 %v195, %v324
  %v350 = vadd.f32 %v196, %v325
  %v351 = vadd.f32 %v197, %v326
  %v352 = vadd.f32 %v198, %v327
  %v353 = vadd.f32 %v199, %v328
  %v354 = vadd.f32 %v200, %v329
  %v355 = vadd.f32 %v201, %v330
  %v356 = vadd.f32 %v202, %v331
  %v357 = vadd.f32 %v203, %v332
  %v358 = vadd.f32 %v204, %v333
  %v359 = vadd.f32 %v205, %v334
  %v360 = vadd.f32 %v206, %v335
  %v361 = vadd.f32 %v207, %v336
  %v362 = vadd.f32 %v208, %v337
  %v363 = vadd.f32 %v209, %v338
  %v364 = vadd.f32 %v210, %v339
  %v365 = vadd.f32 %v211, %v340
  %v366 = vadd.f32 %v212, %v341
  %v367 = vadd.f32 %v213, %v342
  %v368 = vadd.f32 %v214, %v343
  %v369 = vadd.f32 %v215, %v344
  %v370 = vadd.f32 %v216, %v345
  %v371 = vadd.f32 %v217, %v346
  %v372 = vadd.f32 %v218, %v347
  %v373 = vadd.f32 %v219, %v348
  %v375 = vlaneseq
  %v376 = vshrl.u32 %v375, 7
  %v377 = vsub.s32 0, %v376
  %v378 = vrot.slane %v40, %v377
  %v380 = vadd.f32 %v349, %v378
  %v381 = vadd.f32 %v350, %v378
  %v382 = vadd.f32 %v351, %v378
  %v383 = vadd.f32 %v352, %v378
  %v384 = vadd.f32 %v353, %v378
  %v385 = vadd.f32 %v354, %v378
  %v386 = vadd.f32 %v355, %v378
  %v387 = vadd.f32 %v356, %v378
  %v388 = vadd.f32 %v357, %v378
  %v389 = vadd.f32 %v358, %v378
  %v390 = vadd.f32 %v359, %v378
  %v391 = vadd.f32 %v360, %v378
  %v392 = vadd.f32 %v361, %v378
  %v393 = vadd.f32 %v362, %v378
  %v394 = vadd.f32 %v363, %v378
  %v395 = vadd.f32 %v364, %v378
  %v396 = vadd.f32 %v365, %v378
  %v397 = vadd.f32 %v366, %v378
  %v398 = vadd.f32 %v367, %v378
  %v399 = vadd.f32 %v368, %v378
  %v400 = vadd.f32 %v369, %v378
  %v401 = vadd.f32 %v370, %v378
  %v402 = vadd.f32 %v371, %v378
  %v403 = vadd.f32 %v372, %v378
  %v404 = vadd.f32 %v373, %v378
  %v405 = vmul.f32 %v380, 30.0
  %v406 = vmul.f32 %v381, 30.0
  %v407 = vmul.f32 %v382, 30.0
  %v408 = vmul.f32 %v383, 30.0
  %v409 = vmul.f32 %v384, 30.0
  %v410 = vmul.f32 %v385, 30.0
  %v411 = vmul.f32 %v386, 30.0
  %v412 = vmul.f32 %v387, 30.0
  %v413 = vmul.f32 %v388, 30.0
  %v414 = vmul.f32 %v389, 30.0
  %v415 = vmul.f32 %v390, 30.0
  %v416 = vmul.f32 %v391, 30.0
  %v417 = vmul.f32 %v392, 30.0
  %v418 = vmul.f32 %v393, 30.0
  %v419 = vmul.f32 %v394, 30.0
  %v420 = vmul.f32 %v395, 30.0
  %v421 = vmul.f32 %v396, 30.0
  %v422 = vmul.f32 %v397, 30.0
  %v423 = vmul.f32 %v398, 30.0
  %v424 = vmul.f32 %v399, 30.0
  %v425 = vmul.f32 %v400, 30.0
  %v426 = vmul.f32 %v401, 30.0
  %v427 = vmul.f32 %v402, 30.0
  %v428 = vmul.f32 %v403, 30.0
  %v429 = vmul.f32 %v404, 30.0
  %v430 = vand.u32 2147483647, %v380
  %v431 = vand.u32 2147483647, %v381
  %v432 = vand.u32 2147483647, %v382
  %v433 = vand.u32 2147483647, %v383
  %v434 = vand.u32 2147483647, %v384
  %v435 = vand.u32 2147483647, %v385
  %v436 = vand.u32 2147483647, %v386
  %v437 = vand.u32 2147483647, %v387
  %v438 = vand.u32 2147483647, %v388
  %v439 = vand.u32 2147483647, %v389
  %v440 = vand.u32 2147483647, %v390
  %v441 = vand.u32 2147483647, %v391
  %v442 = vand.u32 2147483647, %v392
  %v443 = vand.u32 2147483647, %v393
  %v444 = vand.u32 2147483647, %v394
  %v445 = vand.u32 2147483647, %v395
  %v446 = vand.u32 2147483647, %v396
  %v447 = vand.u32 2147483647, %v397
  %v448 = vand.u32 2147483647, %v398
  %v449 = vand.u32 2147483647, %v399
  %v450 = vand.u32 2147483647, %v400
  %v451 = vand.u32 2147483647, %v401
  %v452 = vand.u32 2147483647, %v402
  %v453 = vand.u32 2147483647, %v403
  %v454 = vand.u32 2147483647, %v404
  %v455 = vmul.f32 %v405, %v430
  %v456 = vmul.f32 %v406, %v431
  %v457 = vmul.f32 %v407, %v432
  %v458 = vmul.f32 %v408, %v433
  %v459 = vmul.f32 %v409, %v434
  %v460 = vmul.f32 %v410, %v435
  %v461 = vmul.f32 %v411, %v436
  %v462 = vmul.f32 %v412, %v437
  %v463 = vmul.f32 %v413, %v438
  %v464 = vmul.f32 %v414, %v439
  %v465 = vmul.f32 %v415, %v440
  %v466 = vmul.f32 %v416, %v441
  %v467 = vmul.f32 %v417, %v442
  %v468 = vmul.f32 %v418, %v443
  %v469 = vmul.f32 %v419, %v444
  %v470 = vmul.f32 %v420, %v445
  %v471 = vmul.f32 %v421, %v446
  %v472 = vmul.f32 %v422, %v447
  %v473 = vmul.f32 %v423, %v448
  %v474 = vmul.f32 %v424, %v449
  %v475 = vmul.f32 %v425, %v450
  %v476 = vmul.f32 %v426, %v451
  %v477 = vmul.f32 %v427, %v452
  %v478 = vmul.f32 %v428, %v453
  %v479 = vmul.f32 %v429, %v454
  %v480 = vadd.f32 %v455, %v405
  %v481 = vadd.f32 %v456, %v406
  %v482 = vadd.f32 %v457, %v407
  %v483 = vadd.f32 %v458, %v408
  %v484 = vadd.f32 %v459, %v409
  %v485 = vadd.f32 %v460, %v410
  %v486 = vadd.f32 %v461, %v411
  %v487 = vadd.f32 %v462, %v412
  %v488 = vadd.f32 %v463, %v413
  %v489 = vadd.f32 %v464, %v414
  %v490 = vadd.f32 %v465, %v415
  %v491 = vadd.f32 %v466, %v416
  %v492 = vadd.f32 %v467, %v417
  %v493 = vadd.f32 %v468, %v418
  %v494 = vadd.f32 %v469, %v419
  %v495 = vadd.f32 %v470, %v420
  %v496 = vadd.f32 %v471, %v421
  %v497 = vadd.f32 %v472, %v422
  %v498 = vadd.f32 %v473, %v423
  %v499 = vadd.f32 %v474, %v424
  %v500 = vadd.f32 %v475, %v425
  %v501 = vadd.f32 %v476, %v426
  %v502 = vadd.f32 %v477, %v427
  %v503 = vadd.f32 %v478, %v428
  %v504 = vadd.f32 %v479, %v429
  %v505 = vand.u32 2147483647, %v480
  %vm506 = vcmp.le.f32.partialorder %v505, 0.7853982
  %vm507 = vcmp.lt.s32.totalorder %v480, 0
  %v508 = vand.u32 %v480, 2139095040
  %v509 = vshrl.u32 %v508, 23
  %v510 = vsub.s32 %v509, 127
  %v511 = vand.u32 2147483647, %v480
  %v512 = vand.u32 %v511, 8388607
  %v513 = vor.u32 %v512, 8388608
  %v514 = vsub.s32 0, %v513
  %v515 = vadd.s32 %v510, 1
  %vm516 = vcmp.gt.s32.totalorder %v515, 0
  %v517 = vsel %vm516, %v515, 0
  %v518 = vshrl.u32 %v517, 5
  %v519 = vand.u32 %v517, 31
  %v520 = vsub.s32 32, %v519
  %v521 = vshrl.u32 683565275, %v520
  %v522 = vshll.u32 683565275, %v519
  %v523 = vshrl.u32 2475754826, %v520
  %v524 = vor.u32 %v522, %v523
  %v525 = vshll.u32 2475754826, %v519
  %v526 = vshrl.u32 2131351028, %v520
  %v527 = vor.u32 %v525, %v526
  %v528 = vshll.u32 2131351028, %v519
  %v529 = vshrl.u32 2102212464, %v520
  %v530 = vor.u32 %v528, %v529
  %v531 = vshll.u32 2102212464, %v519
  %v532 = vshrl.u32 920167782, %v520
  %v533 = vor.u32 %v531, %v532
  %v534 = vshll.u32 920167782, %v519
  %v535 = vshrl.u32 1326507024, %v520
  %v536 = vor.u32 %v534, %v535
  %vm537 = vcmp.lt.s32.totalorder %v518, 1
  %vm538 = vcmp.lt.s32.totalorder %v518, 2
  %vm539 = vcmp.lt.s32.totalorder %v518, 3
  %vm540 = vcmp.lt.s32.totalorder %v518, 4
  %v541 = vsel %vm537, %v521, %v524
  %v542 = vsel %vm540, %v530, 2102212464
  %v543 = vsel %vm539, %v527, %v542
  %v544 = vsel %vm538, %v541, %v543
  %v545 = vsel %vm537, %v524, %v527
  %v546 = vsel %vm540, %v533, 920167782
  %v547 = vsel %vm539, %v530, %v546
  %v548 = vsel %vm538, %v545, %v547
  %v549 = vsel %vm537, %v527, %v530
  %v550 = vsel %vm540, %v536, 1326507024
  %v551 = vsel %vm539, %v533, %v550
  %v552 = vsel %vm538, %v549, %v551
  %v553 = vshll.u32 %v513, 8
  %v554 = vmul.u32.u64.compose %v553, %v552
  %v555 = vextract.low.u32 %v554
  %v556 = vextract.high.u32 %v554
  %v557 = vmul.u32.u64.compose %v553, %v548
  %v558 = vextract.low.u32 %v557
  %v559 = vextract.high.u32 %v557
  %v560 = vmul.u32 %v553, %v544
  %v561 = vadd.s32 %v556, %v558
  %vm562 = vc.u32 %v556, %v558
  %v563 = vadd.s32 %v559, 1
  %v564 = vsel %vm562, %v563, %v559
  %v565 = vadd.s32 %v560, %v564
  %v566 = vadd.s32 %v565, 536870912
  %v567 = vshrl.u32 %v566, 30
  %v568 = vshll.u32 %v567, 30
  %v569 = vsub.s32 %v565, %v568
  %vm570 = vcmp.lt.s32.totalorder %v569, 0
  %v571 = vsub.s32 0, %v569
  %v572 = vsel %vm570, %v571, %v569
  %v573 = vclz %v572
  %v574 = vsub.s32 %v573, 2
  %vm575 = vcmp.gt.s32.totalorder 0, %v574
  %v576 = vsel %vm575, 0, %v574
  %v577 = vsub.s32 32, %v576
  %v578 = vshll.u32 %v569, %v576
  %v579 = vshrl.u32 %v561, %v577
  %v580 = vor.u32 %v578, %v579
  %v581 = vsub.s32 4294967266, %v576
  %v582 = vadd.s32 %v581, 127
  %v583 = vshll.u32 %v582, 23
  %v584 = vor.u32 4788187, %v583
  %v585 = vand.u32 2147483647, %v584
  %v587 = vcvt.s32.f32 %v580
  %v588 = vmul.f32 %v587, %v585
  %v589 = vxor.u32 %v588, 2147483648
  %v590 = vsel %vm507, %v589, %v588
  %v591 = vsub.s32 4, %v567
  %v592 = vsel %vm507, %v591, %v567
  %v593 = vsel %vm506, %v480, %v590
  %v594 = vsel %vm506, 0, %v592
  %v595 = vcosq.f32.pop %v593
  %v596 = vsinq.f32.pop %v593
  %vm597 = vweird.f32 %v480
  %v598 = vadd.s32 %v594, 3
  %v599 = vand.u32 %v598, 3
  %vm600 = vcmp.lt.s32.totalorder %v599, 2
  %vm601 = vcmp.eq.s32.totalorder %v599, 0
  %v602 = vxor.u32 %v596, 2147483648
  %v603 = vsel %vm601, %v595, %v602
  %vm604 = vcmp.eq.s32.totalorder %v599, 2
  %v605 = vxor.u32 %v595, 2147483648
  %v606 = vsel %vm604, %v605, %v596
  %v607 = vsel %vm600, %v603, %v606
  %v608 = vsel %vm597, nan, %v607
  %v609 = vand.u32 2147483647, %v481
  %vm610 = vcmp.le.f32.partialorder %v609, 0.7853982
  %vm611 = vcmp.lt.s32.totalorder %v481, 0
  %v612 = vand.u32 %v481, 2139095040
  %v613 = vshrl.u32 %v612, 23
  %v614 = vsub.s32 %v613, 127
  %v615 = vand.u32 2147483647, %v481
  %v616 = vand.u32 %v615, 8388607
  %v617 = vor.u32 %v616, 8388608
  %v618 = vsub.s32 0, %v617
  %v619 = vadd.s32 %v614, 1
  %vm620 = vcmp.gt.s32.totalorder %v619, 0
  %v621 = vsel %vm620, %v619, 0
  %v622 = vshrl.u32 %v621, 5
  %v623 = vand.u32 %v621, 31
  %v624 = vsub.s32 32, %v623
  %v625 = vshrl.u32 683565275, %v624
  %v626 = vshll.u32 683565275, %v623
  %v627 = vshrl.u32 2475754826, %v624
  %v628 = vor.u32 %v626, %v627
  %v629 = vshll.u32 2475754826, %v623
  %v630 = vshrl.u32 2131351028, %v624
  %v631 = vor.u32 %v629, %v630
  %v632 = vshll.u32 2131351028, %v623
  %v633 = vshrl.u32 2102212464, %v624
  %v634 = vor.u32 %v632, %v633
  %v635 = vshll.u32 2102212464, %v623
  %v636 = vshrl.u32 920167782, %v624
  %v637 = vor.u32 %v635, %v636
  %v638 = vshll.u32 920167782, %v623
  %v639 = vshrl.u32 1326507024, %v624
  %v640 = vor.u32 %v638, %v639
  %vm641 = vcmp.lt.s32.totalorder %v622, 1
  %vm642 = vcmp.lt.s32.totalorder %v622, 2
  %vm643 = vcmp.lt.s32.totalorder %v622, 3
  %vm644 = vcmp.lt.s32.totalorder %v622, 4
  %v645 = vsel %vm641, %v625, %v628
  %v646 = vsel %vm644, %v634, 2102212464
  %v647 = vsel %vm643, %v631, %v646
  %v648 = vsel %vm642, %v645, %v647
  %v649 = vsel %vm641, %v628, %v631
  %v650 = vsel %vm644, %v637, 920167782
  %v651 = vsel %vm643, %v634, %v650
  %v652 = vsel %vm642, %v649, %v651
  %v653 = vsel %vm641, %v631, %v634
  %v654 = vsel %vm644, %v640, 1326507024
  %v655 = vsel %vm643, %v637, %v654
  %v656 = vsel %vm642, %v653, %v655
  %v657 = vshll.u32 %v617, 8
  %v658 = vmul.u32.u64.compose %v657, %v656
  %v659 = vextract.low.u32 %v658
  %v660 = vextract.high.u32 %v658
  %v661 = vmul.u32.u64.compose %v657, %v652
  %v662 = vextract.low.u32 %v661
  %v663 = vextract.high.u32 %v661
  %v664 = vmul.u32 %v657, %v648
  %v665 = vadd.s32 %v660, %v662
  %vm666 = vc.u32 %v660, %v662
  %v667 = vadd.s32 %v663, 1
  %v668 = vsel %vm666, %v667, %v663
  %v669 = vadd.s32 %v664, %v668
  %v670 = vadd.s32 %v669, 536870912
  %v671 = vshrl.u32 %v670, 30
  %v672 = vshll.u32 %v671, 30
  %v673 = vsub.s32 %v669, %v672
  %vm674 = vcmp.lt.s32.totalorder %v673, 0
  %v675 = vsub.s32 0, %v673
  %v676 = vsel %vm674, %v675, %v673
  %v677 = vclz %v676
  %v678 = vsub.s32 %v677, 2
  %vm679 = vcmp.gt.s32.totalorder 0, %v678
  %v680 = vsel %vm679, 0, %v678
  %v681 = vsub.s32 32, %v680
  %v682 = vshll.u32 %v673, %v680
  %v683 = vshrl.u32 %v665, %v681
  %v684 = vor.u32 %v682, %v683
  %v685 = vsub.s32 4294967266, %v680
  %v686 = vadd.s32 %v685, 127
  %v687 = vshll.u32 %v686, 23
  %v688 = vor.u32 4788187, %v687
  %v689 = vand.u32 2147483647, %v688
  %v691 = vcvt.s32.f32 %v684
  %v692 = vmul.f32 %v691, %v689
  %v693 = vxor.u32 %v692, 2147483648
  %v694 = vsel %vm611, %v693, %v692
  %v695 = vsub.s32 4, %v671
  %v696 = vsel %vm611, %v695, %v671
  %v697 = vsel %vm610, %v481, %v694
  %v698 = vsel %vm610, 0, %v696
  %v699 = vcosq.f32.pop %v697
  %v700 = vsinq.f32.pop %v697
  %vm701 = vweird.f32 %v481
  %v702 = vadd.s32 %v698, 3
  %v703 = vand.u32 %v702, 3
  %vm704 = vcmp.lt.s32.totalorder %v703, 2
  %vm705 = vcmp.eq.s32.totalorder %v703, 0
  %v706 = vxor.u32 %v700, 2147483648
  %v707 = vsel %vm705, %v699, %v706
  %vm708 = vcmp.eq.s32.totalorder %v703, 2
  %v709 = vxor.u32 %v699, 2147483648
  %v710 = vsel %vm708, %v709, %v700
  %v711 = vsel %vm704, %v707, %v710
  %v712 = vsel %vm701, nan, %v711
  %v713 = vand.u32 2147483647, %v482
  %vm714 = vcmp.le.f32.partialorder %v713, 0.7853982
  %vm715 = vcmp.lt.s32.totalorder %v482, 0
  %v716 = vand.u32 %v482, 2139095040
  %v717 = vshrl.u32 %v716, 23
  %v718 = vsub.s32 %v717, 127
  %v719 = vand.u32 2147483647, %v482
  %v720 = vand.u32 %v719, 8388607
  %v721 = vor.u32 %v720, 8388608
  %v722 = vsub.s32 0, %v721
  %v723 = vadd.s32 %v718, 1
  %vm724 = vcmp.gt.s32.totalorder %v723, 0
  %v725 = vsel %vm724, %v723, 0
  %v726 = vshrl.u32 %v725, 5
  %v727 = vand.u32 %v725, 31
  %v728 = vsub.s32 32, %v727
  %v729 = vshrl.u32 683565275, %v728
  %v730 = vshll.u32 683565275, %v727
  %v731 = vshrl.u32 2475754826, %v728
  %v732 = vor.u32 %v730, %v731
  %v733 = vshll.u32 2475754826, %v727
  %v734 = vshrl.u32 2131351028, %v728
  %v735 = vor.u32 %v733, %v734
  %v736 = vshll.u32 2131351028, %v727
  %v737 = vshrl.u32 2102212464, %v728
  %v738 = vor.u32 %v736, %v737
  %v739 = vshll.u32 2102212464, %v727
  %v740 = vshrl.u32 920167782, %v728
  %v741 = vor.u32 %v739, %v740
  %v742 = vshll.u32 920167782, %v727
  %v743 = vshrl.u32 1326507024, %v728
  %v744 = vor.u32 %v742, %v743
  %vm745 = vcmp.lt.s32.totalorder %v726, 1
  %vm746 = vcmp.lt.s32.totalorder %v726, 2
  %vm747 = vcmp.lt.s32.totalorder %v726, 3
  %vm748 = vcmp.lt.s32.totalorder %v726, 4
  %v749 = vsel %vm745, %v729, %v732
  %v750 = vsel %vm748, %v738, 2102212464
  %v751 = vsel %vm747, %v735, %v750
  %v752 = vsel %vm746, %v749, %v751
  %v753 = vsel %vm745, %v732, %v735
  %v754 = vsel %vm748, %v741, 920167782
  %v755 = vsel %vm747, %v738, %v754
  %v756 = vsel %vm746, %v753, %v755
  %v757 = vsel %vm745, %v735, %v738
  %v758 = vsel %vm748, %v744, 1326507024
  %v759 = vsel %vm747, %v741, %v758
  %v760 = vsel %vm746, %v757, %v759
  %v761 = vshll.u32 %v721, 8
  %v762 = vmul.u32.u64.compose %v761, %v760
  %v763 = vextract.low.u32 %v762
  %v764 = vextract.high.u32 %v762
  %v765 = vmul.u32.u64.compose %v761, %v756
  %v766 = vextract.low.u32 %v765
  %v767 = vextract.high.u32 %v765
  %v768 = vmul.u32 %v761, %v752
  %v769 = vadd.s32 %v764, %v766
  %vm770 = vc.u32 %v764, %v766
  %v771 = vadd.s32 %v767, 1
  %v772 = vsel %vm770, %v771, %v767
  %v773 = vadd.s32 %v768, %v772
  %v774 = vadd.s32 %v773, 536870912
  %v775 = vshrl.u32 %v774, 30
  %v776 = vshll.u32 %v775, 30
  %v777 = vsub.s32 %v773, %v776
  %vm778 = vcmp.lt.s32.totalorder %v777, 0
  %v779 = vsub.s32 0, %v777
  %v780 = vsel %vm778, %v779, %v777
  %v781 = vclz %v780
  %v782 = vsub.s32 %v781, 2
  %vm783 = vcmp.gt.s32.totalorder 0, %v782
  %v784 = vsel %vm783, 0, %v782
  %v785 = vsub.s32 32, %v784
  %v786 = vshll.u32 %v777, %v784
  %v787 = vshrl.u32 %v769, %v785
  %v788 = vor.u32 %v786, %v787
  %v789 = vsub.s32 4294967266, %v784
  %v790 = vadd.s32 %v789, 127
  %v791 = vshll.u32 %v790, 23
  %v792 = vor.u32 4788187, %v791
  %v793 = vand.u32 2147483647, %v792
  %v795 = vcvt.s32.f32 %v788
  %v796 = vmul.f32 %v795, %v793
  %v797 = vxor.u32 %v796, 2147483648
  %v798 = vsel %vm715, %v797, %v796
  %v799 = vsub.s32 4, %v775
  %v800 = vsel %vm715, %v799, %v775
  %v801 = vsel %vm714, %v482, %v798
  %v802 = vsel %vm714, 0, %v800
  %v803 = vcosq.f32.pop %v801
  %v804 = vsinq.f32.pop %v801
  %vm805 = vweird.f32 %v482
  %v806 = vadd.s32 %v802, 3
  %v807 = vand.u32 %v806, 3
  %vm808 = vcmp.lt.s32.totalorder %v807, 2
  %vm809 = vcmp.eq.s32.totalorder %v807, 0
  %v810 = vxor.u32 %v804, 2147483648
  %v811 = vsel %vm809, %v803, %v810
  %vm812 = vcmp.eq.s32.totalorder %v807, 2
  %v813 = vxor.u32 %v803, 2147483648
  %v814 = vsel %vm812, %v813, %v804
  %v815 = vsel %vm808, %v811, %v814
  %v816 = vsel %vm805, nan, %v815
  %v817 = vand.u32 2147483647, %v483
  %vm818 = vcmp.le.f32.partialorder %v817, 0.7853982
  %vm819 = vcmp.lt.s32.totalorder %v483, 0
  %v820 = vand.u32 %v483, 2139095040
  %v821 = vshrl.u32 %v820, 23
  %v822 = vsub.s32 %v821, 127
  %v823 = vand.u32 2147483647, %v483
  %v824 = vand.u32 %v823, 8388607
  %v825 = vor.u32 %v824, 8388608
  %v826 = vsub.s32 0, %v825
  %v827 = vadd.s32 %v822, 1
  %vm828 = vcmp.gt.s32.totalorder %v827, 0
  %v829 = vsel %vm828, %v827, 0
  %v830 = vshrl.u32 %v829, 5
  %v831 = vand.u32 %v829, 31
  %v832 = vsub.s32 32, %v831
  %v833 = vshrl.u32 683565275, %v832
  %v834 = vshll.u32 683565275, %v831
  %v835 = vshrl.u32 2475754826, %v832
  %v836 = vor.u32 %v834, %v835
  %v837 = vshll.u32 2475754826, %v831
  %v838 = vshrl.u32 2131351028, %v832
  %v839 = vor.u32 %v837, %v838
  %v840 = vshll.u32 2131351028, %v831
  %v841 = vshrl.u32 2102212464, %v832
  %v842 = vor.u32 %v840, %v841
  %v843 = vshll.u32 2102212464, %v831
  %v844 = vshrl.u32 920167782, %v832
  %v845 = vor.u32 %v843, %v844
  %v846 = vshll.u32 920167782, %v831
  %v847 = vshrl.u32 1326507024, %v832
  %v848 = vor.u32 %v846, %v847
  %vm849 = vcmp.lt.s32.totalorder %v830, 1
  %vm850 = vcmp.lt.s32.totalorder %v830, 2
  %vm851 = vcmp.lt.s32.totalorder %v830, 3
  %vm852 = vcmp.lt.s32.totalorder %v830, 4
  %v853 = vsel %vm849, %v833, %v836
  %v854 = vsel %vm852, %v842, 2102212464
  %v855 = vsel %vm851, %v839, %v854
  %v856 = vsel %vm850, %v853, %v855
  %v857 = vsel %vm849, %v836, %v839
  %v858 = vsel %vm852, %v845, 920167782
  %v859 = vsel %vm851, %v842, %v858
  %v860 = vsel %vm850, %v857, %v859
  %v861 = vsel %vm849, %v839, %v842
  %v862 = vsel %vm852, %v848, 1326507024
  %v863 = vsel %vm851, %v845, %v862
  %v864 = vsel %vm850, %v861, %v863
  %v865 = vshll.u32 %v825, 8
  %v866 = vmul.u32.u64.compose %v865, %v864
  %v867 = vextract.low.u32 %v866
  %v868 = vextract.high.u32 %v866
  %v869 = vmul.u32.u64.compose %v865, %v860
  %v870 = vextract.low.u32 %v869
  %v871 = vextract.high.u32 %v869
  %v872 = vmul.u32 %v865, %v856
  %v873 = vadd.s32 %v868, %v870
  %vm874 = vc.u32 %v868, %v870
  %v875 = vadd.s32 %v871, 1
  %v876 = vsel %vm874, %v875, %v871
  %v877 = vadd.s32 %v872, %v876
  %v878 = vadd.s32 %v877, 536870912
  %v879 = vshrl.u32 %v878, 30
  %v880 = vshll.u32 %v879, 30
  %v881 = vsub.s32 %v877, %v880
  %vm882 = vcmp.lt.s32.totalorder %v881, 0
  %v883 = vsub.s32 0, %v881
  %v884 = vsel %vm882, %v883, %v881
  %v885 = vclz %v884
  %v886 = vsub.s32 %v885, 2
  %vm887 = vcmp.gt.s32.totalorder 0, %v886
  %v888 = vsel %vm887, 0, %v886
  %v889 = vsub.s32 32, %v888
  %v890 = vshll.u32 %v881, %v888
  %v891 = vshrl.u32 %v873, %v889
  %v892 = vor.u32 %v890, %v891
  %v893 = vsub.s32 4294967266, %v888
  %v894 = vadd.s32 %v893, 127
  %v895 = vshll.u32 %v894, 23
  %v896 = vor.u32 4788187, %v895
  %v897 = vand.u32 2147483647, %v896
  %v899 = vcvt.s32.f32 %v892
  %v900 = vmul.f32 %v899, %v897
  %v901 = vxor.u32 %v900, 2147483648
  %v902 = vsel %vm819, %v901, %v900
  %v903 = vsub.s32 4, %v879
  %v904 = vsel %vm819, %v903, %v879
  %v905 = vsel %vm818, %v483, %v902
  %v906 = vsel %vm818, 0, %v904
  %v907 = vcosq.f32.pop %v905
  %v908 = vsinq.f32.pop %v905
  %vm909 = vweird.f32 %v483
  %v910 = vadd.s32 %v906, 3
  %v911 = vand.u32 %v910, 3
  %vm912 = vcmp.lt.s32.totalorder %v911, 2
  %vm913 = vcmp.eq.s32.totalorder %v911, 0
  %v914 = vxor.u32 %v908, 2147483648
  %v915 = vsel %vm913, %v907, %v914
  %vm916 = vcmp.eq.s32.totalorder %v911, 2
  %v917 = vxor.u32 %v907, 2147483648
  %v918 = vsel %vm916, %v917, %v908
  %v919 = vsel %vm912, %v915, %v918
  %v920 = vsel %vm909, nan, %v919
  %v921 = vand.u32 2147483647, %v484
  %vm922 = vcmp.le.f32.partialorder %v921, 0.7853982
  %vm923 = vcmp.lt.s32.totalorder %v484, 0
  %v924 = vand.u32 %v484, 2139095040
  %v925 = vshrl.u32 %v924, 23
  %v926 = vsub.s32 %v925, 127
  %v927 = vand.u32 2147483647, %v484
  %v928 = vand.u32 %v927, 8388607
  %v929 = vor.u32 %v928, 8388608
  %v930 = vsub.s32 0, %v929
  %v931 = vadd.s32 %v926, 1
  %vm932 = vcmp.gt.s32.totalorder %v931, 0
  %v933 = vsel %vm932, %v931, 0
  %v934 = vshrl.u32 %v933, 5
  %v935 = vand.u32 %v933, 31
  %v936 = vsub.s32 32, %v935
  %v937 = vshrl.u32 683565275, %v936
  %v938 = vshll.u32 683565275, %v935
  %v939 = vshrl.u32 2475754826, %v936
  %v940 = vor.u32 %v938, %v939
  %v941 = vshll.u32 2475754826, %v935
  %v942 = vshrl.u32 2131351028, %v936
  %v943 = vor.u32 %v941, %v942
  %v944 = vshll.u32 2131351028, %v935
  %v945 = vshrl.u32 2102212464, %v936
  %v946 = vor.u32 %v944, %v945
  %v947 = vshll.u32 2102212464, %v935
  %v948 = vshrl.u32 920167782, %v936
  %v949 = vor.u32 %v947, %v948
  %v950 = vshll.u32 920167782, %v935
  %v951 = vshrl.u32 1326507024, %v936
  %v952 = vor.u32 %v950, %v951
  %vm953 = vcmp.lt.s32.totalorder %v934, 1
  %vm954 = vcmp.lt.s32.totalorder %v934, 2
  %vm955 = vcmp.lt.s32.totalorder %v934, 3
  %vm956 = vcmp.lt.s32.totalorder %v934, 4
  %v957 = vsel %vm953, %v937, %v940
  %v958 = vsel %vm956, %v946, 2102212464
  %v959 = vsel %vm955, %v943, %v958
  %v960 = vsel %vm954, %v957, %v959
  %v961 = vsel %vm953, %v940, %v943
  %v962 = vsel %vm956, %v949, 920167782
  %v963 = vsel %vm955, %v946, %v962
  %v964 = vsel %vm954, %v961, %v963
  %v965 = vsel %vm953, %v943, %v946
  %v966 = vsel %vm956, %v952, 1326507024
  %v967 = vsel %vm955, %v949, %v966
  %v968 = vsel %vm954, %v965, %v967
  %v969 = vshll.u32 %v929, 8
  %v970 = vmul.u32.u64.compose %v969, %v968
  %v971 = vextract.low.u32 %v970
  %v972 = vextract.high.u32 %v970
  %v973 = vmul.u32.u64.compose %v969, %v964
  %v974 = vextract.low.u32 %v973
  %v975 = vextract.high.u32 %v973
  %v976 = vmul.u32 %v969, %v960
  %v977 = vadd.s32 %v972, %v974
  %vm978 = vc.u32 %v972, %v974
  %v979 = vadd.s32 %v975, 1
  %v980 = vsel %vm978, %v979, %v975
  %v981 = vadd.s32 %v976, %v980
  %v982 = vadd.s32 %v981, 536870912
  %v983 = vshrl.u32 %v982, 30
  %v984 = vshll.u32 %v983, 30
  %v985 = vsub.s32 %v981, %v984
  %vm986 = vcmp.lt.s32.totalorder %v985, 0
  %v987 = vsub.s32 0, %v985
  %v988 = vsel %vm986, %v987, %v985
  %v989 = vclz %v988
  %v990 = vsub.s32 %v989, 2
  %vm991 = vcmp.gt.s32.totalorder 0, %v990
  %v992 = vsel %vm991, 0, %v990
  %v993 = vsub.s32 32, %v992
  %v994 = vshll.u32 %v985, %v992
  %v995 = vshrl.u32 %v977, %v993
  %v996 = vor.u32 %v994, %v995
  %v997 = vsub.s32 4294967266, %v992
  %v998 = vadd.s32 %v997, 127
  %v999 = vshll.u32 %v998, 23
  %v1000 = vor.u32 4788187, %v999
  %v1001 = vand.u32 2147483647, %v1000
  %v1003 = vcvt.s32.f32 %v996
  %v1004 = vmul.f32 %v1003, %v1001
  %v1005 = vxor.u32 %v1004, 2147483648
  %v1006 = vsel %vm923, %v1005, %v1004
  %v1007 = vsub.s32 4, %v983
  %v1008 = vsel %vm923, %v1007, %v983
  %v1009 = vsel %vm922, %v484, %v1006
  %v1010 = vsel %vm922, 0, %v1008
  %v1011 = vcosq.f32.pop %v1009
  %v1012 = vsinq.f32.pop %v1009
  %vm1013 = vweird.f32 %v484
  %v1014 = vadd.s32 %v1010, 3
  %v1015 = vand.u32 %v1014, 3
  %vm1016 = vcmp.lt.s32.totalorder %v1015, 2
  %vm1017 = vcmp.eq.s32.totalorder %v1015, 0
  %v1018 = vxor.u32 %v1012, 2147483648
  %v1019 = vsel %vm1017, %v1011, %v1018
  %vm1020 = vcmp.eq.s32.totalorder %v1015, 2
  %v1021 = vxor.u32 %v1011, 2147483648
  %v1022 = vsel %vm1020, %v1021, %v1012
  %v1023 = vsel %vm1016, %v1019, %v1022
  %v1024 = vsel %vm1013, nan, %v1023
  %v1025 = vand.u32 2147483647, %v485
  %vm1026 = vcmp.le.f32.partialorder %v1025, 0.7853982
  %vm1027 = vcmp.lt.s32.totalorder %v485, 0
  %v1028 = vand.u32 %v485, 2139095040
  %v1029 = vshrl.u32 %v1028, 23
  %v1030 = vsub.s32 %v1029, 127
  %v1031 = vand.u32 2147483647, %v485
  %v1032 = vand.u32 %v1031, 8388607
  %v1033 = vor.u32 %v1032, 8388608
  %v1034 = vsub.s32 0, %v1033
  %v1035 = vadd.s32 %v1030, 1
  %vm1036 = vcmp.gt.s32.totalorder %v1035, 0
  %v1037 = vsel %vm1036, %v1035, 0
  %v1038 = vshrl.u32 %v1037, 5
  %v1039 = vand.u32 %v1037, 31
  %v1040 = vsub.s32 32, %v1039
  %v1041 = vshrl.u32 683565275, %v1040
  %v1042 = vshll.u32 683565275, %v1039
  %v1043 = vshrl.u32 2475754826, %v1040
  %v1044 = vor.u32 %v1042, %v1043
  %v1045 = vshll.u32 2475754826, %v1039
  %v1046 = vshrl.u32 2131351028, %v1040
  %v1047 = vor.u32 %v1045, %v1046
  %v1048 = vshll.u32 2131351028, %v1039
  %v1049 = vshrl.u32 2102212464, %v1040
  %v1050 = vor.u32 %v1048, %v1049
  %v1051 = vshll.u32 2102212464, %v1039
  %v1052 = vshrl.u32 920167782, %v1040
  %v1053 = vor.u32 %v1051, %v1052
  %v1054 = vshll.u32 920167782, %v1039
  %v1055 = vshrl.u32 1326507024, %v1040
  %v1056 = vor.u32 %v1054, %v1055
  %vm1057 = vcmp.lt.s32.totalorder %v1038, 1
  %vm1058 = vcmp.lt.s32.totalorder %v1038, 2
  %vm1059 = vcmp.lt.s32.totalorder %v1038, 3
  %vm1060 = vcmp.lt.s32.totalorder %v1038, 4
  %v1061 = vsel %vm1057, %v1041, %v1044
  %v1062 = vsel %vm1060, %v1050, 2102212464
  %v1063 = vsel %vm1059, %v1047, %v1062
  %v1064 = vsel %vm1058, %v1061, %v1063
  %v1065 = vsel %vm1057, %v1044, %v1047
  %v1066 = vsel %vm1060, %v1053, 920167782
  %v1067 = vsel %vm1059, %v1050, %v1066
  %v1068 = vsel %vm1058, %v1065, %v1067
  %v1069 = vsel %vm1057, %v1047, %v1050
  %v1070 = vsel %vm1060, %v1056, 1326507024
  %v1071 = vsel %vm1059, %v1053, %v1070
  %v1072 = vsel %vm1058, %v1069, %v1071
  %v1073 = vshll.u32 %v1033, 8
  %v1074 = vmul.u32.u64.compose %v1073, %v1072
  %v1075 = vextract.low.u32 %v1074
  %v1076 = vextract.high.u32 %v1074
  %v1077 = vmul.u32.u64.compose %v1073, %v1068
  %v1078 = vextract.low.u32 %v1077
  %v1079 = vextract.high.u32 %v1077
  %v1080 = vmul.u32 %v1073, %v1064
  %v1081 = vadd.s32 %v1076, %v1078
  %vm1082 = vc.u32 %v1076, %v1078
  %v1083 = vadd.s32 %v1079, 1
  %v1084 = vsel %vm1082, %v1083, %v1079
  %v1085 = vadd.s32 %v1080, %v1084
  %v1086 = vadd.s32 %v1085, 536870912
  %v1087 = vshrl.u32 %v1086, 30
  %v1088 = vshll.u32 %v1087, 30
  %v1089 = vsub.s32 %v1085, %v1088
  %vm1090 = vcmp.lt.s32.totalorder %v1089, 0
  %v1091 = vsub.s32 0, %v1089
  %v1092 = vsel %vm1090, %v1091, %v1089
  %v1093 = vclz %v1092
  %v1094 = vsub.s32 %v1093, 2
  %vm1095 = vcmp.gt.s32.totalorder 0, %v1094
  %v1096 = vsel %vm1095, 0, %v1094
  %v1097 = vsub.s32 32, %v1096
  %v1098 = vshll.u32 %v1089, %v1096
  %v1099 = vshrl.u32 %v1081, %v1097
  %v1100 = vor.u32 %v1098, %v1099
  %v1101 = vsub.s32 4294967266, %v1096
  %v1102 = vadd.s32 %v1101, 127
  %v1103 = vshll.u32 %v1102, 23
  %v1104 = vor.u32 4788187, %v1103
  %v1105 = vand.u32 2147483647, %v1104
  %v1107 = vcvt.s32.f32 %v1100
  %v1108 = vmul.f32 %v1107, %v1105
  %v1109 = vxor.u32 %v1108, 2147483648
  %v1110 = vsel %vm1027, %v1109, %v1108
  %v1111 = vsub.s32 4, %v1087
  %v1112 = vsel %vm1027, %v1111, %v1087
  %v1113 = vsel %vm1026, %v485, %v1110
  %v1114 = vsel %vm1026, 0, %v1112
  %v1115 = vcosq.f32.pop %v1113
  %v1116 = vsinq.f32.pop %v1113
  %vm1117 = vweird.f32 %v485
  %v1118 = vadd.s32 %v1114, 3
  %v1119 = vand.u32 %v1118, 3
  %vm1120 = vcmp.lt.s32.totalorder %v1119, 2
  %vm1121 = vcmp.eq.s32.totalorder %v1119, 0
  %v1122 = vxor.u32 %v1116, 2147483648
  %v1123 = vsel %vm1121, %v1115, %v1122
  %vm1124 = vcmp.eq.s32.totalorder %v1119, 2
  %v1125 = vxor.u32 %v1115, 2147483648
  %v1126 = vsel %vm1124, %v1125, %v1116
  %v1127 = vsel %vm1120, %v1123, %v1126
  %v1128 = vsel %vm1117, nan, %v1127
  %v1129 = vand.u32 2147483647, %v486
  %vm1130 = vcmp.le.f32.partialorder %v1129, 0.7853982
  %vm1131 = vcmp.lt.s32.totalorder %v486, 0
  %v1132 = vand.u32 %v486, 2139095040
  %v1133 = vshrl.u32 %v1132, 23
  %v1134 = vsub.s32 %v1133, 127
  %v1135 = vand.u32 2147483647, %v486
  %v1136 = vand.u32 %v1135, 8388607
  %v1137 = vor.u32 %v1136, 8388608
  %v1138 = vsub.s32 0, %v1137
  %v1139 = vadd.s32 %v1134, 1
  %vm1140 = vcmp.gt.s32.totalorder %v1139, 0
  %v1141 = vsel %vm1140, %v1139, 0
  %v1142 = vshrl.u32 %v1141, 5
  %v1143 = vand.u32 %v1141, 31
  %v1144 = vsub.s32 32, %v1143
  %v1145 = vshrl.u32 683565275, %v1144
  %v1146 = vshll.u32 683565275, %v1143
  %v1147 = vshrl.u32 2475754826, %v1144
  %v1148 = vor.u32 %v1146, %v1147
  %v1149 = vshll.u32 2475754826, %v1143
  %v1150 = vshrl.u32 2131351028, %v1144
  %v1151 = vor.u32 %v1149, %v1150
  %v1152 = vshll.u32 2131351028, %v1143
  %v1153 = vshrl.u32 2102212464, %v1144
  %v1154 = vor.u32 %v1152, %v1153
  %v1155 = vshll.u32 2102212464, %v1143
  %v1156 = vshrl.u32 920167782, %v1144
  %v1157 = vor.u32 %v1155, %v1156
  %v1158 = vshll.u32 920167782, %v1143
  %v1159 = vshrl.u32 1326507024, %v1144
  %v1160 = vor.u32 %v1158, %v1159
  %vm1161 = vcmp.lt.s32.totalorder %v1142, 1
  %vm1162 = vcmp.lt.s32.totalorder %v1142, 2
  %vm1163 = vcmp.lt.s32.totalorder %v1142, 3
  %vm1164 = vcmp.lt.s32.totalorder %v1142, 4
  %v1165 = vsel %vm1161, %v1145, %v1148
  %v1166 = vsel %vm1164, %v1154, 2102212464
  %v1167 = vsel %vm1163, %v1151, %v1166
  %v1168 = vsel %vm1162, %v1165, %v1167
  %v1169 = vsel %vm1161, %v1148, %v1151
  %v1170 = vsel %vm1164, %v1157, 920167782
  %v1171 = vsel %vm1163, %v1154, %v1170
  %v1172 = vsel %vm1162, %v1169, %v1171
  %v1173 = vsel %vm1161, %v1151, %v1154
  %v1174 = vsel %vm1164, %v1160, 1326507024
  %v1175 = vsel %vm1163, %v1157, %v1174
  %v1176 = vsel %vm1162, %v1173, %v1175
  %v1177 = vshll.u32 %v1137, 8
  %v1178 = vmul.u32.u64.compose %v1177, %v1176
  %v1179 = vextract.low.u32 %v1178
  %v1180 = vextract.high.u32 %v1178
  %v1181 = vmul.u32.u64.compose %v1177, %v1172
  %v1182 = vextract.low.u32 %v1181
  %v1183 = vextract.high.u32 %v1181
  %v1184 = vmul.u32 %v1177, %v1168
  %v1185 = vadd.s32 %v1180, %v1182
  %vm1186 = vc.u32 %v1180, %v1182
  %v1187 = vadd.s32 %v1183, 1
  %v1188 = vsel %vm1186, %v1187, %v1183
  %v1189 = vadd.s32 %v1184, %v1188
  %v1190 = vadd.s32 %v1189, 536870912
  %v1191 = vshrl.u32 %v1190, 30
  %v1192 = vshll.u32 %v1191, 30
  %v1193 = vsub.s32 %v1189, %v1192
  %vm1194 = vcmp.lt.s32.totalorder %v1193, 0
  %v1195 = vsub.s32 0, %v1193
  %v1196 = vsel %vm1194, %v1195, %v1193
  %v1197 = vclz %v1196
  %v1198 = vsub.s32 %v1197, 2
  %vm1199 = vcmp.gt.s32.totalorder 0, %v1198
  %v1200 = vsel %vm1199, 0, %v1198
  %v1201 = vsub.s32 32, %v1200
  %v1202 = vshll.u32 %v1193, %v1200
  %v1203 = vshrl.u32 %v1185, %v1201
  %v1204 = vor.u32 %v1202, %v1203
  %v1205 = vsub.s32 4294967266, %v1200
  %v1206 = vadd.s32 %v1205, 127
  %v1207 = vshll.u32 %v1206, 23
  %v1208 = vor.u32 4788187, %v1207
  %v1209 = vand.u32 2147483647, %v1208
  %v1211 = vcvt.s32.f32 %v1204
  %v1212 = vmul.f32 %v1211, %v1209
  %v1213 = vxor.u32 %v1212, 2147483648
  %v1214 = vsel %vm1131, %v1213, %v1212
  %v1215 = vsub.s32 4, %v1191
  %v1216 = vsel %vm1131, %v1215, %v1191
  %v1217 = vsel %vm1130, %v486, %v1214
  %v1218 = vsel %vm1130, 0, %v1216
  %v1219 = vcosq.f32.pop %v1217
  %v1220 = vsinq.f32.pop %v1217
  %vm1221 = vweird.f32 %v486
  %v1222 = vadd.s32 %v1218, 3
  %v1223 = vand.u32 %v1222, 3
  %vm1224 = vcmp.lt.s32.totalorder %v1223, 2
  %vm1225 = vcmp.eq.s32.totalorder %v1223, 0
  %v1226 = vxor.u32 %v1220, 2147483648
  %v1227 = vsel %vm1225, %v1219, %v1226
  %vm1228 = vcmp.eq.s32.totalorder %v1223, 2
  %v1229 = vxor.u32 %v1219, 2147483648
  %v1230 = vsel %vm1228, %v1229, %v1220
  %v1231 = vsel %vm1224, %v1227, %v1230
  %v1232 = vsel %vm1221, nan, %v1231
  %v1233 = vand.u32 2147483647, %v487
  %vm1234 = vcmp.le.f32.partialorder %v1233, 0.7853982
  %vm1235 = vcmp.lt.s32.totalorder %v487, 0
  %v1236 = vand.u32 %v487, 2139095040
  %v1237 = vshrl.u32 %v1236, 23
  %v1238 = vsub.s32 %v1237, 127
  %v1239 = vand.u32 2147483647, %v487
  %v1240 = vand.u32 %v1239, 8388607
  %v1241 = vor.u32 %v1240, 8388608
  %v1242 = vsub.s32 0, %v1241
  %v1243 = vadd.s32 %v1238, 1
  %vm1244 = vcmp.gt.s32.totalorder %v1243, 0
  %v1245 = vsel %vm1244, %v1243, 0
  %v1246 = vshrl.u32 %v1245, 5
  %v1247 = vand.u32 %v1245, 31
  %v1248 = vsub.s32 32, %v1247
  %v1249 = vshrl.u32 683565275, %v1248
  %v1250 = vshll.u32 683565275, %v1247
  %v1251 = vshrl.u32 2475754826, %v1248
  %v1252 = vor.u32 %v1250, %v1251
  %v1253 = vshll.u32 2475754826, %v1247
  %v1254 = vshrl.u32 2131351028, %v1248
  %v1255 = vor.u32 %v1253, %v1254
  %v1256 = vshll.u32 2131351028, %v1247
  %v1257 = vshrl.u32 2102212464, %v1248
  %v1258 = vor.u32 %v1256, %v1257
  %v1259 = vshll.u32 2102212464, %v1247
  %v1260 = vshrl.u32 920167782, %v1248
  %v1261 = vor.u32 %v1259, %v1260
  %v1262 = vshll.u32 920167782, %v1247
  %v1263 = vshrl.u32 1326507024, %v1248
  %v1264 = vor.u32 %v1262, %v1263
  %vm1265 = vcmp.lt.s32.totalorder %v1246, 1
  %vm1266 = vcmp.lt.s32.totalorder %v1246, 2
  %vm1267 = vcmp.lt.s32.totalorder %v1246, 3
  %vm1268 = vcmp.lt.s32.totalorder %v1246, 4
  %v1269 = vsel %vm1265, %v1249, %v1252
  %v1270 = vsel %vm1268, %v1258, 2102212464
  %v1271 = vsel %vm1267, %v1255, %v1270
  %v1272 = vsel %vm1266, %v1269, %v1271
  %v1273 = vsel %vm1265, %v1252, %v1255
  %v1274 = vsel %vm1268, %v1261, 920167782
  %v1275 = vsel %vm1267, %v1258, %v1274
  %v1276 = vsel %vm1266, %v1273, %v1275
  %v1277 = vsel %vm1265, %v1255, %v1258
  %v1278 = vsel %vm1268, %v1264, 1326507024
  %v1279 = vsel %vm1267, %v1261, %v1278
  %v1280 = vsel %vm1266, %v1277, %v1279
  %v1281 = vshll.u32 %v1241, 8
  %v1282 = vmul.u32.u64.compose %v1281, %v1280
  %v1283 = vextract.low.u32 %v1282
  %v1284 = vextract.high.u32 %v1282
  %v1285 = vmul.u32.u64.compose %v1281, %v1276
  %v1286 = vextract.low.u32 %v1285
  %v1287 = vextract.high.u32 %v1285
  %v1288 = vmul.u32 %v1281, %v1272
  %v1289 = vadd.s32 %v1284, %v1286
  %vm1290 = vc.u32 %v1284, %v1286
  %v1291 = vadd.s32 %v1287, 1
  %v1292 = vsel %vm1290, %v1291, %v1287
  %v1293 = vadd.s32 %v1288, %v1292
  %v1294 = vadd.s32 %v1293, 536870912
  %v1295 = vshrl.u32 %v1294, 30
  %v1296 = vshll.u32 %v1295, 30
  %v1297 = vsub.s32 %v1293, %v1296
  %vm1298 = vcmp.lt.s32.totalorder %v1297, 0
  %v1299 = vsub.s32 0, %v1297
  %v1300 = vsel %vm1298, %v1299, %v1297
  %v1301 = vclz %v1300
  %v1302 = vsub.s32 %v1301, 2
  %vm1303 = vcmp.gt.s32.totalorder 0, %v1302
  %v1304 = vsel %vm1303, 0, %v1302
  %v1305 = vsub.s32 32, %v1304
  %v1306 = vshll.u32 %v1297, %v1304
  %v1307 = vshrl.u32 %v1289, %v1305
  %v1308 = vor.u32 %v1306, %v1307
  %v1309 = vsub.s32 4294967266, %v1304
  %v1310 = vadd.s32 %v1309, 127
  %v1311 = vshll.u32 %v1310, 23
  %v1312 = vor.u32 4788187, %v1311
  %v1313 = vand.u32 2147483647, %v1312
  %v1315 = vcvt.s32.f32 %v1308
  %v1316 = vmul.f32 %v1315, %v1313
  %v1317 = vxor.u32 %v1316, 2147483648
  %v1318 = vsel %vm1235, %v1317, %v1316
  %v1319 = vsub.s32 4, %v1295
  %v1320 = vsel %vm1235, %v1319, %v1295
  %v1321 = vsel %vm1234, %v487, %v1318
  %v1322 = vsel %vm1234, 0, %v1320
  %v1323 = vcosq.f32.pop %v1321
  %v1324 = vsinq.f32.pop %v1321
  %vm1325 = vweird.f32 %v487
  %v1326 = vadd.s32 %v1322, 3
  %v1327 = vand.u32 %v1326, 3
  %vm1328 = vcmp.lt.s32.totalorder %v1327, 2
  %vm1329 = vcmp.eq.s32.totalorder %v1327, 0
  %v1330 = vxor.u32 %v1324, 2147483648
  %v1331 = vsel %vm1329, %v1323, %v1330
  %vm1332 = vcmp.eq.s32.totalorder %v1327, 2
  %v1333 = vxor.u32 %v1323, 2147483648
  %v1334 = vsel %vm1332, %v1333, %v1324
  %v1335 = vsel %vm1328, %v1331, %v1334
  %v1336 = vsel %vm1325, nan, %v1335
  %v1337 = vand.u32 2147483647, %v488
  %vm1338 = vcmp.le.f32.partialorder %v1337, 0.7853982
  %vm1339 = vcmp.lt.s32.totalorder %v488, 0
  %v1340 = vand.u32 %v488, 2139095040
  %v1341 = vshrl.u32 %v1340, 23
  %v1342 = vsub.s32 %v1341, 127
  %v1343 = vand.u32 2147483647, %v488
  %v1344 = vand.u32 %v1343, 8388607
  %v1345 = vor.u32 %v1344, 8388608
  %v1346 = vsub.s32 0, %v1345
  %v1347 = vadd.s32 %v1342, 1
  %vm1348 = vcmp.gt.s32.totalorder %v1347, 0
  %v1349 = vsel %vm1348, %v1347, 0
  %v1350 = vshrl.u32 %v1349, 5
  %v1351 = vand.u32 %v1349, 31
  %v1352 = vsub.s32 32, %v1351
  %v1353 = vshrl.u32 683565275, %v1352
  %v1354 = vshll.u32 683565275, %v1351
  %v1355 = vshrl.u32 2475754826, %v1352
  %v1356 = vor.u32 %v1354, %v1355
  %v1357 = vshll.u32 2475754826, %v1351
  %v1358 = vshrl.u32 2131351028, %v1352
  %v1359 = vor.u32 %v1357, %v1358
  %v1360 = vshll.u32 2131351028, %v1351
  %v1361 = vshrl.u32 2102212464, %v1352
  %v1362 = vor.u32 %v1360, %v1361
  %v1363 = vshll.u32 2102212464, %v1351
  %v1364 = vshrl.u32 920167782, %v1352
  %v1365 = vor.u32 %v1363, %v1364
  %v1366 = vshll.u32 920167782, %v1351
  %v1367 = vshrl.u32 1326507024, %v1352
  %v1368 = vor.u32 %v1366, %v1367
  %vm1369 = vcmp.lt.s32.totalorder %v1350, 1
  %vm1370 = vcmp.lt.s32.totalorder %v1350, 2
  %vm1371 = vcmp.lt.s32.totalorder %v1350, 3
  %vm1372 = vcmp.lt.s32.totalorder %v1350, 4
  %v1373 = vsel %vm1369, %v1353, %v1356
  %v1374 = vsel %vm1372, %v1362, 2102212464
  %v1375 = vsel %vm1371, %v1359, %v1374
  %v1376 = vsel %vm1370, %v1373, %v1375
  %v1377 = vsel %vm1369, %v1356, %v1359
  %v1378 = vsel %vm1372, %v1365, 920167782
  %v1379 = vsel %vm1371, %v1362, %v1378
  %v1380 = vsel %vm1370, %v1377, %v1379
  %v1381 = vsel %vm1369, %v1359, %v1362
  %v1382 = vsel %vm1372, %v1368, 1326507024
  %v1383 = vsel %vm1371, %v1365, %v1382
  %v1384 = vsel %vm1370, %v1381, %v1383
  %v1385 = vshll.u32 %v1345, 8
  %v1386 = vmul.u32.u64.compose %v1385, %v1384
  %v1387 = vextract.low.u32 %v1386
  %v1388 = vextract.high.u32 %v1386
  %v1389 = vmul.u32.u64.compose %v1385, %v1380
  %v1390 = vextract.low.u32 %v1389
  %v1391 = vextract.high.u32 %v1389
  %v1392 = vmul.u32 %v1385, %v1376
  %v1393 = vadd.s32 %v1388, %v1390
  %vm1394 = vc.u32 %v1388, %v1390
  %v1395 = vadd.s32 %v1391, 1
  %v1396 = vsel %vm1394, %v1395, %v1391
  %v1397 = vadd.s32 %v1392, %v1396
  %v1398 = vadd.s32 %v1397, 536870912
  %v1399 = vshrl.u32 %v1398, 30
  %v1400 = vshll.u32 %v1399, 30
  %v1401 = vsub.s32 %v1397, %v1400
  %vm1402 = vcmp.lt.s32.totalorder %v1401, 0
  %v1403 = vsub.s32 0, %v1401
  %v1404 = vsel %vm1402, %v1403, %v1401
  %v1405 = vclz %v1404
  %v1406 = vsub.s32 %v1405, 2
  %vm1407 = vcmp.gt.s32.totalorder 0, %v1406
  %v1408 = vsel %vm1407, 0, %v1406
  %v1409 = vsub.s32 32, %v1408
  %v1410 = vshll.u32 %v1401, %v1408
  %v1411 = vshrl.u32 %v1393, %v1409
  %v1412 = vor.u32 %v1410, %v1411
  %v1413 = vsub.s32 4294967266, %v1408
  %v1414 = vadd.s32 %v1413, 127
  %v1415 = vshll.u32 %v1414, 23
  %v1416 = vor.u32 4788187, %v1415
  %v1417 = vand.u32 2147483647, %v1416
  %v1419 = vcvt.s32.f32 %v1412
  %v1420 = vmul.f32 %v1419, %v1417
  %v1421 = vxor.u32 %v1420, 2147483648
  %v1422 = vsel %vm1339, %v1421, %v1420
  %v1423 = vsub.s32 4, %v1399
  %v1424 = vsel %vm1339, %v1423, %v1399
  %v1425 = vsel %vm1338, %v488, %v1422
  %v1426 = vsel %vm1338, 0, %v1424
  %v1427 = vcosq.f32.pop %v1425
  %v1428 = vsinq.f32.pop %v1425
  %vm1429 = vweird.f32 %v488
  %v1430 = vadd.s32 %v1426, 3
  %v1431 = vand.u32 %v1430, 3
  %vm1432 = vcmp.lt.s32.totalorder %v1431, 2
  %vm1433 = vcmp.eq.s32.totalorder %v1431, 0
  %v1434 = vxor.u32 %v1428, 2147483648
  %v1435 = vsel %vm1433, %v1427, %v1434
  %vm1436 = vcmp.eq.s32.totalorder %v1431, 2
  %v1437 = vxor.u32 %v1427, 2147483648
  %v1438 = vsel %vm1436, %v1437, %v1428
  %v1439 = vsel %vm1432, %v1435, %v1438
  %v1440 = vsel %vm1429, nan, %v1439
  %v1441 = vand.u32 2147483647, %v489
  %vm1442 = vcmp.le.f32.partialorder %v1441, 0.7853982
  %vm1443 = vcmp.lt.s32.totalorder %v489, 0
  %v1444 = vand.u32 %v489, 2139095040
  %v1445 = vshrl.u32 %v1444, 23
  %v1446 = vsub.s32 %v1445, 127
  %v1447 = vand.u32 2147483647, %v489
  %v1448 = vand.u32 %v1447, 8388607
  %v1449 = vor.u32 %v1448, 8388608
  %v1450 = vsub.s32 0, %v1449
  %v1451 = vadd.s32 %v1446, 1
  %vm1452 = vcmp.gt.s32.totalorder %v1451, 0
  %v1453 = vsel %vm1452, %v1451, 0
  %v1454 = vshrl.u32 %v1453, 5
  %v1455 = vand.u32 %v1453, 31
  %v1456 = vsub.s32 32, %v1455
  %v1457 = vshrl.u32 683565275, %v1456
  %v1458 = vshll.u32 683565275, %v1455
  %v1459 = vshrl.u32 2475754826, %v1456
  %v1460 = vor.u32 %v1458, %v1459
  %v1461 = vshll.u32 2475754826, %v1455
  %v1462 = vshrl.u32 2131351028, %v1456
  %v1463 = vor.u32 %v1461, %v1462
  %v1464 = vshll.u32 2131351028, %v1455
  %v1465 = vshrl.u32 2102212464, %v1456
  %v1466 = vor.u32 %v1464, %v1465
  %v1467 = vshll.u32 2102212464, %v1455
  %v1468 = vshrl.u32 920167782, %v1456
  %v1469 = vor.u32 %v1467, %v1468
  %v1470 = vshll.u32 920167782, %v1455
  %v1471 = vshrl.u32 1326507024, %v1456
  %v1472 = vor.u32 %v1470, %v1471
  %vm1473 = vcmp.lt.s32.totalorder %v1454, 1
  %vm1474 = vcmp.lt.s32.totalorder %v1454, 2
  %vm1475 = vcmp.lt.s32.totalorder %v1454, 3
  %vm1476 = vcmp.lt.s32.totalorder %v1454, 4
  %v1477 = vsel %vm1473, %v1457, %v1460
  %v1478 = vsel %vm1476, %v1466, 2102212464
  %v1479 = vsel %vm1475, %v1463, %v1478
  %v1480 = vsel %vm1474, %v1477, %v1479
  %v1481 = vsel %vm1473, %v1460, %v1463
  %v1482 = vsel %vm1476, %v1469, 920167782
  %v1483 = vsel %vm1475, %v1466, %v1482
  %v1484 = vsel %vm1474, %v1481, %v1483
  %v1485 = vsel %vm1473, %v1463, %v1466
  %v1486 = vsel %vm1476, %v1472, 1326507024
  %v1487 = vsel %vm1475, %v1469, %v1486
  %v1488 = vsel %vm1474, %v1485, %v1487
  %v1489 = vshll.u32 %v1449, 8
  %v1490 = vmul.u32.u64.compose %v1489, %v1488
  %v1491 = vextract.low.u32 %v1490
  %v1492 = vextract.high.u32 %v1490
  %v1493 = vmul.u32.u64.compose %v1489, %v1484
  %v1494 = vextract.low.u32 %v1493
  %v1495 = vextract.high.u32 %v1493
  %v1496 = vmul.u32 %v1489, %v1480
  %v1497 = vadd.s32 %v1492, %v1494
  %vm1498 = vc.u32 %v1492, %v1494
  %v1499 = vadd.s32 %v1495, 1
  %v1500 = vsel %vm1498, %v1499, %v1495
  %v1501 = vadd.s32 %v1496, %v1500
  %v1502 = vadd.s32 %v1501, 536870912
  %v1503 = vshrl.u32 %v1502, 30
  %v1504 = vshll.u32 %v1503, 30
  %v1505 = vsub.s32 %v1501, %v1504
  %vm1506 = vcmp.lt.s32.totalorder %v1505, 0
  %v1507 = vsub.s32 0, %v1505
  %v1508 = vsel %vm1506, %v1507, %v1505
  %v1509 = vclz %v1508
  %v1510 = vsub.s32 %v1509, 2
  %vm1511 = vcmp.gt.s32.totalorder 0, %v1510
  %v1512 = vsel %vm1511, 0, %v1510
  %v1513 = vsub.s32 32, %v1512
  %v1514 = vshll.u32 %v1505, %v1512
  %v1515 = vshrl.u32 %v1497, %v1513
  %v1516 = vor.u32 %v1514, %v1515
  %v1517 = vsub.s32 4294967266, %v1512
  %v1518 = vadd.s32 %v1517, 127
  %v1519 = vshll.u32 %v1518, 23
  %v1520 = vor.u32 4788187, %v1519
  %v1521 = vand.u32 2147483647, %v1520
  %v1523 = vcvt.s32.f32 %v1516
  %v1524 = vmul.f32 %v1523, %v1521
  %v1525 = vxor.u32 %v1524, 2147483648
  %v1526 = vsel %vm1443, %v1525, %v1524
  %v1527 = vsub.s32 4, %v1503
  %v1528 = vsel %vm1443, %v1527, %v1503
  %v1529 = vsel %vm1442, %v489, %v1526
  %v1530 = vsel %vm1442, 0, %v1528
  %v1531 = vcosq.f32.pop %v1529
  %v1532 = vsinq.f32.pop %v1529
  %vm1533 = vweird.f32 %v489
  %v1534 = vadd.s32 %v1530, 3
  %v1535 = vand.u32 %v1534, 3
  %vm1536 = vcmp.lt.s32.totalorder %v1535, 2
  %vm1537 = vcmp.eq.s32.totalorder %v1535, 0
  %v1538 = vxor.u32 %v1532, 2147483648
  %v1539 = vsel %vm1537, %v1531, %v1538
  %vm1540 = vcmp.eq.s32.totalorder %v1535, 2
  %v1541 = vxor.u32 %v1531, 2147483648
  %v1542 = vsel %vm1540, %v1541, %v1532
  %v1543 = vsel %vm1536, %v1539, %v1542
  %v1544 = vsel %vm1533, nan, %v1543
  %v1545 = vand.u32 2147483647, %v490
  %vm1546 = vcmp.le.f32.partialorder %v1545, 0.7853982
  %vm1547 = vcmp.lt.s32.totalorder %v490, 0
  %v1548 = vand.u32 %v490, 2139095040
  %v1549 = vshrl.u32 %v1548, 23
  %v1550 = vsub.s32 %v1549, 127
  %v1551 = vand.u32 2147483647, %v490
  %v1552 = vand.u32 %v1551, 8388607
  %v1553 = vor.u32 %v1552, 8388608
  %v1554 = vsub.s32 0, %v1553
  %v1555 = vadd.s32 %v1550, 1
  %vm1556 = vcmp.gt.s32.totalorder %v1555, 0
  %v1557 = vsel %vm1556, %v1555, 0
  %v1558 = vshrl.u32 %v1557, 5
  %v1559 = vand.u32 %v1557, 31
  %v1560 = vsub.s32 32, %v1559
  %v1561 = vshrl.u32 683565275, %v1560
  %v1562 = vshll.u32 683565275, %v1559
  %v1563 = vshrl.u32 2475754826, %v1560
  %v1564 = vor.u32 %v1562, %v1563
  %v1565 = vshll.u32 2475754826, %v1559
  %v1566 = vshrl.u32 2131351028, %v1560
  %v1567 = vor.u32 %v1565, %v1566
  %v1568 = vshll.u32 2131351028, %v1559
  %v1569 = vshrl.u32 2102212464, %v1560
  %v1570 = vor.u32 %v1568, %v1569
  %v1571 = vshll.u32 2102212464, %v1559
  %v1572 = vshrl.u32 920167782, %v1560
  %v1573 = vor.u32 %v1571, %v1572
  %v1574 = vshll.u32 920167782, %v1559
  %v1575 = vshrl.u32 1326507024, %v1560
  %v1576 = vor.u32 %v1574, %v1575
  %vm1577 = vcmp.lt.s32.totalorder %v1558, 1
  %vm1578 = vcmp.lt.s32.totalorder %v1558, 2
  %vm1579 = vcmp.lt.s32.totalorder %v1558, 3
  %vm1580 = vcmp.lt.s32.totalorder %v1558, 4
  %v1581 = vsel %vm1577, %v1561, %v1564
  %v1582 = vsel %vm1580, %v1570, 2102212464
  %v1583 = vsel %vm1579, %v1567, %v1582
  %v1584 = vsel %vm1578, %v1581, %v1583
  %v1585 = vsel %vm1577, %v1564, %v1567
  %v1586 = vsel %vm1580, %v1573, 920167782
  %v1587 = vsel %vm1579, %v1570, %v1586
  %v1588 = vsel %vm1578, %v1585, %v1587
  %v1589 = vsel %vm1577, %v1567, %v1570
  %v1590 = vsel %vm1580, %v1576, 1326507024
  %v1591 = vsel %vm1579, %v1573, %v1590
  %v1592 = vsel %vm1578, %v1589, %v1591
  %v1593 = vshll.u32 %v1553, 8
  %v1594 = vmul.u32.u64.compose %v1593, %v1592
  %v1595 = vextract.low.u32 %v1594
  %v1596 = vextract.high.u32 %v1594
  %v1597 = vmul.u32.u64.compose %v1593, %v1588
  %v1598 = vextract.low.u32 %v1597
  %v1599 = vextract.high.u32 %v1597
  %v1600 = vmul.u32 %v1593, %v1584
  %v1601 = vadd.s32 %v1596, %v1598
  %vm1602 = vc.u32 %v1596, %v1598
  %v1603 = vadd.s32 %v1599, 1
  %v1604 = vsel %vm1602, %v1603, %v1599
  %v1605 = vadd.s32 %v1600, %v1604
  %v1606 = vadd.s32 %v1605, 536870912
  %v1607 = vshrl.u32 %v1606, 30
  %v1608 = vshll.u32 %v1607, 30
  %v1609 = vsub.s32 %v1605, %v1608
  %vm1610 = vcmp.lt.s32.totalorder %v1609, 0
  %v1611 = vsub.s32 0, %v1609
  %v1612 = vsel %vm1610, %v1611, %v1609
  %v1613 = vclz %v1612
  %v1614 = vsub.s32 %v1613, 2
  %vm1615 = vcmp.gt.s32.totalorder 0, %v1614
  %v1616 = vsel %vm1615, 0, %v1614
  %v1617 = vsub.s32 32, %v1616
  %v1618 = vshll.u32 %v1609, %v1616
  %v1619 = vshrl.u32 %v1601, %v1617
  %v1620 = vor.u32 %v1618, %v1619
  %v1621 = vsub.s32 4294967266, %v1616
  %v1622 = vadd.s32 %v1621, 127
  %v1623 = vshll.u32 %v1622, 23
  %v1624 = vor.u32 4788187, %v1623
  %v1625 = vand.u32 2147483647, %v1624
  %v1627 = vcvt.s32.f32 %v1620
  %v1628 = vmul.f32 %v1627, %v1625
  %v1629 = vxor.u32 %v1628, 2147483648
  %v1630 = vsel %vm1547, %v1629, %v1628
  %v1631 = vsub.s32 4, %v1607
  %v1632 = vsel %vm1547, %v1631, %v1607
  %v1633 = vsel %vm1546, %v490, %v1630
  %v1634 = vsel %vm1546, 0, %v1632
  %v1635 = vcosq.f32.pop %v1633
  %v1636 = vsinq.f32.pop %v1633
  %vm1637 = vweird.f32 %v490
  %v1638 = vadd.s32 %v1634, 3
  %v1639 = vand.u32 %v1638, 3
  %vm1640 = vcmp.lt.s32.totalorder %v1639, 2
  %vm1641 = vcmp.eq.s32.totalorder %v1639, 0
  %v1642 = vxor.u32 %v1636, 2147483648
  %v1643 = vsel %vm1641, %v1635, %v1642
  %vm1644 = vcmp.eq.s32.totalorder %v1639, 2
  %v1645 = vxor.u32 %v1635, 2147483648
  %v1646 = vsel %vm1644, %v1645, %v1636
  %v1647 = vsel %vm1640, %v1643, %v1646
  %v1648 = vsel %vm1637, nan, %v1647
  %v1649 = vand.u32 2147483647, %v491
  %vm1650 = vcmp.le.f32.partialorder %v1649, 0.7853982
  %vm1651 = vcmp.lt.s32.totalorder %v491, 0
  %v1652 = vand.u32 %v491, 2139095040
  %v1653 = vshrl.u32 %v1652, 23
  %v1654 = vsub.s32 %v1653, 127
  %v1655 = vand.u32 2147483647, %v491
  %v1656 = vand.u32 %v1655, 8388607
  %v1657 = vor.u32 %v1656, 8388608
  %v1658 = vsub.s32 0, %v1657
  %v1659 = vadd.s32 %v1654, 1
  %vm1660 = vcmp.gt.s32.totalorder %v1659, 0
  %v1661 = vsel %vm1660, %v1659, 0
  %v1662 = vshrl.u32 %v1661, 5
  %v1663 = vand.u32 %v1661, 31
  %v1664 = vsub.s32 32, %v1663
  %v1665 = vshrl.u32 683565275, %v1664
  %v1666 = vshll.u32 683565275, %v1663
  %v1667 = vshrl.u32 2475754826, %v1664
  %v1668 = vor.u32 %v1666, %v1667
  %v1669 = vshll.u32 2475754826, %v1663
  %v1670 = vshrl.u32 2131351028, %v1664
  %v1671 = vor.u32 %v1669, %v1670
  %v1672 = vshll.u32 2131351028, %v1663
  %v1673 = vshrl.u32 2102212464, %v1664
  %v1674 = vor.u32 %v1672, %v1673
  %v1675 = vshll.u32 2102212464, %v1663
  %v1676 = vshrl.u32 920167782, %v1664
  %v1677 = vor.u32 %v1675, %v1676
  %v1678 = vshll.u32 920167782, %v1663
  %v1679 = vshrl.u32 1326507024, %v1664
  %v1680 = vor.u32 %v1678, %v1679
  %vm1681 = vcmp.lt.s32.totalorder %v1662, 1
  %vm1682 = vcmp.lt.s32.totalorder %v1662, 2
  %vm1683 = vcmp.lt.s32.totalorder %v1662, 3
  %vm1684 = vcmp.lt.s32.totalorder %v1662, 4
  %v1685 = vsel %vm1681, %v1665, %v1668
  %v1686 = vsel %vm1684, %v1674, 2102212464
  %v1687 = vsel %vm1683, %v1671, %v1686
  %v1688 = vsel %vm1682, %v1685, %v1687
  %v1689 = vsel %vm1681, %v1668, %v1671
  %v1690 = vsel %vm1684, %v1677, 920167782
  %v1691 = vsel %vm1683, %v1674, %v1690
  %v1692 = vsel %vm1682, %v1689, %v1691
  %v1693 = vsel %vm1681, %v1671, %v1674
  %v1694 = vsel %vm1684, %v1680, 1326507024
  %v1695 = vsel %vm1683, %v1677, %v1694
  %v1696 = vsel %vm1682, %v1693, %v1695
  %v1697 = vshll.u32 %v1657, 8
  %v1698 = vmul.u32.u64.compose %v1697, %v1696
  %v1699 = vextract.low.u32 %v1698
  %v1700 = vextract.high.u32 %v1698
  %v1701 = vmul.u32.u64.compose %v1697, %v1692
  %v1702 = vextract.low.u32 %v1701
  %v1703 = vextract.high.u32 %v1701
  %v1704 = vmul.u32 %v1697, %v1688
  %v1705 = vadd.s32 %v1700, %v1702
  %vm1706 = vc.u32 %v1700, %v1702
  %v1707 = vadd.s32 %v1703, 1
  %v1708 = vsel %vm1706, %v1707, %v1703
  %v1709 = vadd.s32 %v1704, %v1708
  %v1710 = vadd.s32 %v1709, 536870912
  %v1711 = vshrl.u32 %v1710, 30
  %v1712 = vshll.u32 %v1711, 30
  %v1713 = vsub.s32 %v1709, %v1712
  %vm1714 = vcmp.lt.s32.totalorder %v1713, 0
  %v1715 = vsub.s32 0, %v1713
  %v1716 = vsel %vm1714, %v1715, %v1713
  %v1717 = vclz %v1716
  %v1718 = vsub.s32 %v1717, 2
  %vm1719 = vcmp.gt.s32.totalorder 0, %v1718
  %v1720 = vsel %vm1719, 0, %v1718
  %v1721 = vsub.s32 32, %v1720
  %v1722 = vshll.u32 %v1713, %v1720
  %v1723 = vshrl.u32 %v1705, %v1721
  %v1724 = vor.u32 %v1722, %v1723
  %v1725 = vsub.s32 4294967266, %v1720
  %v1726 = vadd.s32 %v1725, 127
  %v1727 = vshll.u32 %v1726, 23
  %v1728 = vor.u32 4788187, %v1727
  %v1729 = vand.u32 2147483647, %v1728
  %v1731 = vcvt.s32.f32 %v1724
  %v1732 = vmul.f32 %v1731, %v1729
  %v1733 = vxor.u32 %v1732, 2147483648
  %v1734 = vsel %vm1651, %v1733, %v1732
  %v1735 = vsub.s32 4, %v1711
  %v1736 = vsel %vm1651, %v1735, %v1711
  %v1737 = vsel %vm1650, %v491, %v1734
  %v1738 = vsel %vm1650, 0, %v1736
  %v1739 = vcosq.f32.pop %v1737
  %v1740 = vsinq.f32.pop %v1737
  %vm1741 = vweird.f32 %v491
  %v1742 = vadd.s32 %v1738, 3
  %v1743 = vand.u32 %v1742, 3
  %vm1744 = vcmp.lt.s32.totalorder %v1743, 2
  %vm1745 = vcmp.eq.s32.totalorder %v1743, 0
  %v1746 = vxor.u32 %v1740, 2147483648
  %v1747 = vsel %vm1745, %v1739, %v1746
  %vm1748 = vcmp.eq.s32.totalorder %v1743, 2
  %v1749 = vxor.u32 %v1739, 2147483648
  %v1750 = vsel %vm1748, %v1749, %v1740
  %v1751 = vsel %vm1744, %v1747, %v1750
  %v1752 = vsel %vm1741, nan, %v1751
  %v1753 = vand.u32 2147483647, %v492
  %vm1754 = vcmp.le.f32.partialorder %v1753, 0.7853982
  %vm1755 = vcmp.lt.s32.totalorder %v492, 0
  %v1756 = vand.u32 %v492, 2139095040
  %v1757 = vshrl.u32 %v1756, 23
  %v1758 = vsub.s32 %v1757, 127
  %v1759 = vand.u32 2147483647, %v492
  %v1760 = vand.u32 %v1759, 8388607
  %v1761 = vor.u32 %v1760, 8388608
  %v1762 = vsub.s32 0, %v1761
  %v1763 = vadd.s32 %v1758, 1
  %vm1764 = vcmp.gt.s32.totalorder %v1763, 0
  %v1765 = vsel %vm1764, %v1763, 0
  %v1766 = vshrl.u32 %v1765, 5
  %v1767 = vand.u32 %v1765, 31
  %v1768 = vsub.s32 32, %v1767
  %v1769 = vshrl.u32 683565275, %v1768
  %v1770 = vshll.u32 683565275, %v1767
  %v1771 = vshrl.u32 2475754826, %v1768
  %v1772 = vor.u32 %v1770, %v1771
  %v1773 = vshll.u32 2475754826, %v1767
  %v1774 = vshrl.u32 2131351028, %v1768
  %v1775 = vor.u32 %v1773, %v1774
  %v1776 = vshll.u32 2131351028, %v1767
  %v1777 = vshrl.u32 2102212464, %v1768
  %v1778 = vor.u32 %v1776, %v1777
  %v1779 = vshll.u32 2102212464, %v1767
  %v1780 = vshrl.u32 920167782, %v1768
  %v1781 = vor.u32 %v1779, %v1780
  %v1782 = vshll.u32 920167782, %v1767
  %v1783 = vshrl.u32 1326507024, %v1768
  %v1784 = vor.u32 %v1782, %v1783
  %vm1785 = vcmp.lt.s32.totalorder %v1766, 1
  %vm1786 = vcmp.lt.s32.totalorder %v1766, 2
  %vm1787 = vcmp.lt.s32.totalorder %v1766, 3
  %vm1788 = vcmp.lt.s32.totalorder %v1766, 4
  %v1789 = vsel %vm1785, %v1769, %v1772
  %v1790 = vsel %vm1788, %v1778, 2102212464
  %v1791 = vsel %vm1787, %v1775, %v1790
  %v1792 = vsel %vm1786, %v1789, %v1791
  %v1793 = vsel %vm1785, %v1772, %v1775
  %v1794 = vsel %vm1788, %v1781, 920167782
  %v1795 = vsel %vm1787, %v1778, %v1794
  %v1796 = vsel %vm1786, %v1793, %v1795
  %v1797 = vsel %vm1785, %v1775, %v1778
  %v1798 = vsel %vm1788, %v1784, 1326507024
  %v1799 = vsel %vm1787, %v1781, %v1798
  %v1800 = vsel %vm1786, %v1797, %v1799
  %v1801 = vshll.u32 %v1761, 8
  %v1802 = vmul.u32.u64.compose %v1801, %v1800
  %v1803 = vextract.low.u32 %v1802
  %v1804 = vextract.high.u32 %v1802
  %v1805 = vmul.u32.u64.compose %v1801, %v1796
  %v1806 = vextract.low.u32 %v1805
  %v1807 = vextract.high.u32 %v1805
  %v1808 = vmul.u32 %v1801, %v1792
  %v1809 = vadd.s32 %v1804, %v1806
  %vm1810 = vc.u32 %v1804, %v1806
  %v1811 = vadd.s32 %v1807, 1
  %v1812 = vsel %vm1810, %v1811, %v1807
  %v1813 = vadd.s32 %v1808, %v1812
  %v1814 = vadd.s32 %v1813, 536870912
  %v1815 = vshrl.u32 %v1814, 30
  %v1816 = vshll.u32 %v1815, 30
  %v1817 = vsub.s32 %v1813, %v1816
  %vm1818 = vcmp.lt.s32.totalorder %v1817, 0
  %v1819 = vsub.s32 0, %v1817
  %v1820 = vsel %vm1818, %v1819, %v1817
  %v1821 = vclz %v1820
  %v1822 = vsub.s32 %v1821, 2
  %vm1823 = vcmp.gt.s32.totalorder 0, %v1822
  %v1824 = vsel %vm1823, 0, %v1822
  %v1825 = vsub.s32 32, %v1824
  %v1826 = vshll.u32 %v1817, %v1824
  %v1827 = vshrl.u32 %v1809, %v1825
  %v1828 = vor.u32 %v1826, %v1827
  %v1829 = vsub.s32 4294967266, %v1824
  %v1830 = vadd.s32 %v1829, 127
  %v1831 = vshll.u32 %v1830, 23
  %v1832 = vor.u32 4788187, %v1831
  %v1833 = vand.u32 2147483647, %v1832
  %v1835 = vcvt.s32.f32 %v1828
  %v1836 = vmul.f32 %v1835, %v1833
  %v1837 = vxor.u32 %v1836, 2147483648
  %v1838 = vsel %vm1755, %v1837, %v1836
  %v1839 = vsub.s32 4, %v1815
  %v1840 = vsel %vm1755, %v1839, %v1815
  %v1841 = vsel %vm1754, %v492, %v1838
  %v1842 = vsel %vm1754, 0, %v1840
  %v1843 = vcosq.f32.pop %v1841
  %v1844 = vsinq.f32.pop %v1841
  %vm1845 = vweird.f32 %v492
  %v1846 = vadd.s32 %v1842, 3
  %v1847 = vand.u32 %v1846, 3
  %vm1848 = vcmp.lt.s32.totalorder %v1847, 2
  %vm1849 = vcmp.eq.s32.totalorder %v1847, 0
  %v1850 = vxor.u32 %v1844, 2147483648
  %v1851 = vsel %vm1849, %v1843, %v1850
  %vm1852 = vcmp.eq.s32.totalorder %v1847, 2
  %v1853 = vxor.u32 %v1843, 2147483648
  %v1854 = vsel %vm1852, %v1853, %v1844
  %v1855 = vsel %vm1848, %v1851, %v1854
  %v1856 = vsel %vm1845, nan, %v1855
  %v1857 = vand.u32 2147483647, %v493
  %vm1858 = vcmp.le.f32.partialorder %v1857, 0.7853982
  %vm1859 = vcmp.lt.s32.totalorder %v493, 0
  %v1860 = vand.u32 %v493, 2139095040
  %v1861 = vshrl.u32 %v1860, 23
  %v1862 = vsub.s32 %v1861, 127
  %v1863 = vand.u32 2147483647, %v493
  %v1864 = vand.u32 %v1863, 8388607
  %v1865 = vor.u32 %v1864, 8388608
  %v1866 = vsub.s32 0, %v1865
  %v1867 = vadd.s32 %v1862, 1
  %vm1868 = vcmp.gt.s32.totalorder %v1867, 0
  %v1869 = vsel %vm1868, %v1867, 0
  %v1870 = vshrl.u32 %v1869, 5
  %v1871 = vand.u32 %v1869, 31
  %v1872 = vsub.s32 32, %v1871
  %v1873 = vshrl.u32 683565275, %v1872
  %v1874 = vshll.u32 683565275, %v1871
  %v1875 = vshrl.u32 2475754826, %v1872
  %v1876 = vor.u32 %v1874, %v1875
  %v1877 = vshll.u32 2475754826, %v1871
  %v1878 = vshrl.u32 2131351028, %v1872
  %v1879 = vor.u32 %v1877, %v1878
  %v1880 = vshll.u32 2131351028, %v1871
  %v1881 = vshrl.u32 2102212464, %v1872
  %v1882 = vor.u32 %v1880, %v1881
  %v1883 = vshll.u32 2102212464, %v1871
  %v1884 = vshrl.u32 920167782, %v1872
  %v1885 = vor.u32 %v1883, %v1884
  %v1886 = vshll.u32 920167782, %v1871
  %v1887 = vshrl.u32 1326507024, %v1872
  %v1888 = vor.u32 %v1886, %v1887
  %vm1889 = vcmp.lt.s32.totalorder %v1870, 1
  %vm1890 = vcmp.lt.s32.totalorder %v1870, 2
  %vm1891 = vcmp.lt.s32.totalorder %v1870, 3
  %vm1892 = vcmp.lt.s32.totalorder %v1870, 4
  %v1893 = vsel %vm1889, %v1873, %v1876
  %v1894 = vsel %vm1892, %v1882, 2102212464
  %v1895 = vsel %vm1891, %v1879, %v1894
  %v1896 = vsel %vm1890, %v1893, %v1895
  %v1897 = vsel %vm1889, %v1876, %v1879
  %v1898 = vsel %vm1892, %v1885, 920167782
  %v1899 = vsel %vm1891, %v1882, %v1898
  %v1900 = vsel %vm1890, %v1897, %v1899
  %v1901 = vsel %vm1889, %v1879, %v1882
  %v1902 = vsel %vm1892, %v1888, 1326507024
  %v1903 = vsel %vm1891, %v1885, %v1902
  %v1904 = vsel %vm1890, %v1901, %v1903
  %v1905 = vshll.u32 %v1865, 8
  %v1906 = vmul.u32.u64.compose %v1905, %v1904
  %v1907 = vextract.low.u32 %v1906
  %v1908 = vextract.high.u32 %v1906
  %v1909 = vmul.u32.u64.compose %v1905, %v1900
  %v1910 = vextract.low.u32 %v1909
  %v1911 = vextract.high.u32 %v1909
  %v1912 = vmul.u32 %v1905, %v1896
  %v1913 = vadd.s32 %v1908, %v1910
  %vm1914 = vc.u32 %v1908, %v1910
  %v1915 = vadd.s32 %v1911, 1
  %v1916 = vsel %vm1914, %v1915, %v1911
  %v1917 = vadd.s32 %v1912, %v1916
  %v1918 = vadd.s32 %v1917, 536870912
  %v1919 = vshrl.u32 %v1918, 30
  %v1920 = vshll.u32 %v1919, 30
  %v1921 = vsub.s32 %v1917, %v1920
  %vm1922 = vcmp.lt.s32.totalorder %v1921, 0
  %v1923 = vsub.s32 0, %v1921
  %v1924 = vsel %vm1922, %v1923, %v1921
  %v1925 = vclz %v1924
  %v1926 = vsub.s32 %v1925, 2
  %vm1927 = vcmp.gt.s32.totalorder 0, %v1926
  %v1928 = vsel %vm1927, 0, %v1926
  %v1929 = vsub.s32 32, %v1928
  %v1930 = vshll.u32 %v1921, %v1928
  %v1931 = vshrl.u32 %v1913, %v1929
  %v1932 = vor.u32 %v1930, %v1931
  %v1933 = vsub.s32 4294967266, %v1928
  %v1934 = vadd.s32 %v1933, 127
  %v1935 = vshll.u32 %v1934, 23
  %v1936 = vor.u32 4788187, %v1935
  %v1937 = vand.u32 2147483647, %v1936
  %v1939 = vcvt.s32.f32 %v1932
  %v1940 = vmul.f32 %v1939, %v1937
  %v1941 = vxor.u32 %v1940, 2147483648
  %v1942 = vsel %vm1859, %v1941, %v1940
  %v1943 = vsub.s32 4, %v1919
  %v1944 = vsel %vm1859, %v1943, %v1919
  %v1945 = vsel %vm1858, %v493, %v1942
  %v1946 = vsel %vm1858, 0, %v1944
  %v1947 = vcosq.f32.pop %v1945
  %v1948 = vsinq.f32.pop %v1945
  %vm1949 = vweird.f32 %v493
  %v1950 = vadd.s32 %v1946, 3
  %v1951 = vand.u32 %v1950, 3
  %vm1952 = vcmp.lt.s32.totalorder %v1951, 2
  %vm1953 = vcmp.eq.s32.totalorder %v1951, 0
  %v1954 = vxor.u32 %v1948, 2147483648
  %v1955 = vsel %vm1953, %v1947, %v1954
  %vm1956 = vcmp.eq.s32.totalorder %v1951, 2
  %v1957 = vxor.u32 %v1947, 2147483648
  %v1958 = vsel %vm1956, %v1957, %v1948
  %v1959 = vsel %vm1952, %v1955, %v1958
  %v1960 = vsel %vm1949, nan, %v1959
  %v1961 = vand.u32 2147483647, %v494
  %vm1962 = vcmp.le.f32.partialorder %v1961, 0.7853982
  %vm1963 = vcmp.lt.s32.totalorder %v494, 0
  %v1964 = vand.u32 %v494, 2139095040
  %v1965 = vshrl.u32 %v1964, 23
  %v1966 = vsub.s32 %v1965, 127
  %v1967 = vand.u32 2147483647, %v494
  %v1968 = vand.u32 %v1967, 8388607
  %v1969 = vor.u32 %v1968, 8388608
  %v1970 = vsub.s32 0, %v1969
  %v1971 = vadd.s32 %v1966, 1
  %vm1972 = vcmp.gt.s32.totalorder %v1971, 0
  %v1973 = vsel %vm1972, %v1971, 0
  %v1974 = vshrl.u32 %v1973, 5
  %v1975 = vand.u32 %v1973, 31
  %v1976 = vsub.s32 32, %v1975
  %v1977 = vshrl.u32 683565275, %v1976
  %v1978 = vshll.u32 683565275, %v1975
  %v1979 = vshrl.u32 2475754826, %v1976
  %v1980 = vor.u32 %v1978, %v1979
  %v1981 = vshll.u32 2475754826, %v1975
  %v1982 = vshrl.u32 2131351028, %v1976
  %v1983 = vor.u32 %v1981, %v1982
  %v1984 = vshll.u32 2131351028, %v1975
  %v1985 = vshrl.u32 2102212464, %v1976
  %v1986 = vor.u32 %v1984, %v1985
  %v1987 = vshll.u32 2102212464, %v1975
  %v1988 = vshrl.u32 920167782, %v1976
  %v1989 = vor.u32 %v1987, %v1988
  %v1990 = vshll.u32 920167782, %v1975
  %v1991 = vshrl.u32 1326507024, %v1976
  %v1992 = vor.u32 %v1990, %v1991
  %vm1993 = vcmp.lt.s32.totalorder %v1974, 1
  %vm1994 = vcmp.lt.s32.totalorder %v1974, 2
  %vm1995 = vcmp.lt.s32.totalorder %v1974, 3
  %vm1996 = vcmp.lt.s32.totalorder %v1974, 4
  %v1997 = vsel %vm1993, %v1977, %v1980
  %v1998 = vsel %vm1996, %v1986, 2102212464
  %v1999 = vsel %vm1995, %v1983, %v1998
  %v2000 = vsel %vm1994, %v1997, %v1999
  %v2001 = vsel %vm1993, %v1980, %v1983
  %v2002 = vsel %vm1996, %v1989, 920167782
  %v2003 = vsel %vm1995, %v1986, %v2002
  %v2004 = vsel %vm1994, %v2001, %v2003
  %v2005 = vsel %vm1993, %v1983, %v1986
  %v2006 = vsel %vm1996, %v1992, 1326507024
  %v2007 = vsel %vm1995, %v1989, %v2006
  %v2008 = vsel %vm1994, %v2005, %v2007
  %v2009 = vshll.u32 %v1969, 8
  %v2010 = vmul.u32.u64.compose %v2009, %v2008
  %v2011 = vextract.low.u32 %v2010
  %v2012 = vextract.high.u32 %v2010
  %v2013 = vmul.u32.u64.compose %v2009, %v2004
  %v2014 = vextract.low.u32 %v2013
  %v2015 = vextract.high.u32 %v2013
  %v2016 = vmul.u32 %v2009, %v2000
  %v2017 = vadd.s32 %v2012, %v2014
  %vm2018 = vc.u32 %v2012, %v2014
  %v2019 = vadd.s32 %v2015, 1
  %v2020 = vsel %vm2018, %v2019, %v2015
  %v2021 = vadd.s32 %v2016, %v2020
  %v2022 = vadd.s32 %v2021, 536870912
  %v2023 = vshrl.u32 %v2022, 30
  %v2024 = vshll.u32 %v2023, 30
  %v2025 = vsub.s32 %v2021, %v2024
  %vm2026 = vcmp.lt.s32.totalorder %v2025, 0
  %v2027 = vsub.s32 0, %v2025
  %v2028 = vsel %vm2026, %v2027, %v2025
  %v2029 = vclz %v2028
  %v2030 = vsub.s32 %v2029, 2
  %vm2031 = vcmp.gt.s32.totalorder 0, %v2030
  %v2032 = vsel %vm2031, 0, %v2030
  %v2033 = vsub.s32 32, %v2032
  %v2034 = vshll.u32 %v2025, %v2032
  %v2035 = vshrl.u32 %v2017, %v2033
  %v2036 = vor.u32 %v2034, %v2035
  %v2037 = vsub.s32 4294967266, %v2032
  %v2038 = vadd.s32 %v2037, 127
  %v2039 = vshll.u32 %v2038, 23
  %v2040 = vor.u32 4788187, %v2039
  %v2041 = vand.u32 2147483647, %v2040
  %v2043 = vcvt.s32.f32 %v2036
  %v2044 = vmul.f32 %v2043, %v2041
  %v2045 = vxor.u32 %v2044, 2147483648
  %v2046 = vsel %vm1963, %v2045, %v2044
  %v2047 = vsub.s32 4, %v2023
  %v2048 = vsel %vm1963, %v2047, %v2023
  %v2049 = vsel %vm1962, %v494, %v2046
  %v2050 = vsel %vm1962, 0, %v2048
  %v2051 = vcosq.f32.pop %v2049
  %v2052 = vsinq.f32.pop %v2049
  %vm2053 = vweird.f32 %v494
  %v2054 = vadd.s32 %v2050, 3
  %v2055 = vand.u32 %v2054, 3
  %vm2056 = vcmp.lt.s32.totalorder %v2055, 2
  %vm2057 = vcmp.eq.s32.totalorder %v2055, 0
  %v2058 = vxor.u32 %v2052, 2147483648
  %v2059 = vsel %vm2057, %v2051, %v2058
  %vm2060 = vcmp.eq.s32.totalorder %v2055, 2
  %v2061 = vxor.u32 %v2051, 2147483648
  %v2062 = vsel %vm2060, %v2061, %v2052
  %v2063 = vsel %vm2056, %v2059, %v2062
  %v2064 = vsel %vm2053, nan, %v2063
  %v2065 = vand.u32 2147483647, %v495
  %vm2066 = vcmp.le.f32.partialorder %v2065, 0.7853982
  %vm2067 = vcmp.lt.s32.totalorder %v495, 0
  %v2068 = vand.u32 %v495, 2139095040
  %v2069 = vshrl.u32 %v2068, 23
  %v2070 = vsub.s32 %v2069, 127
  %v2071 = vand.u32 2147483647, %v495
  %v2072 = vand.u32 %v2071, 8388607
  %v2073 = vor.u32 %v2072, 8388608
  %v2074 = vsub.s32 0, %v2073
  %v2075 = vadd.s32 %v2070, 1
  %vm2076 = vcmp.gt.s32.totalorder %v2075, 0
  %v2077 = vsel %vm2076, %v2075, 0
  %v2078 = vshrl.u32 %v2077, 5
  %v2079 = vand.u32 %v2077, 31
  %v2080 = vsub.s32 32, %v2079
  %v2081 = vshrl.u32 683565275, %v2080
  %v2082 = vshll.u32 683565275, %v2079
  %v2083 = vshrl.u32 2475754826, %v2080
  %v2084 = vor.u32 %v2082, %v2083
  %v2085 = vshll.u32 2475754826, %v2079
  %v2086 = vshrl.u32 2131351028, %v2080
  %v2087 = vor.u32 %v2085, %v2086
  %v2088 = vshll.u32 2131351028, %v2079
  %v2089 = vshrl.u32 2102212464, %v2080
  %v2090 = vor.u32 %v2088, %v2089
  %v2091 = vshll.u32 2102212464, %v2079
  %v2092 = vshrl.u32 920167782, %v2080
  %v2093 = vor.u32 %v2091, %v2092
  %v2094 = vshll.u32 920167782, %v2079
  %v2095 = vshrl.u32 1326507024, %v2080
  %v2096 = vor.u32 %v2094, %v2095
  %vm2097 = vcmp.lt.s32.totalorder %v2078, 1
  %vm2098 = vcmp.lt.s32.totalorder %v2078, 2
  %vm2099 = vcmp.lt.s32.totalorder %v2078, 3
  %vm2100 = vcmp.lt.s32.totalorder %v2078, 4
  %v2101 = vsel %vm2097, %v2081, %v2084
  %v2102 = vsel %vm2100, %v2090, 2102212464
  %v2103 = vsel %vm2099, %v2087, %v2102
  %v2104 = vsel %vm2098, %v2101, %v2103
  %v2105 = vsel %vm2097, %v2084, %v2087
  %v2106 = vsel %vm2100, %v2093, 920167782
  %v2107 = vsel %vm2099, %v2090, %v2106
  %v2108 = vsel %vm2098, %v2105, %v2107
  %v2109 = vsel %vm2097, %v2087, %v2090
  %v2110 = vsel %vm2100, %v2096, 1326507024
  %v2111 = vsel %vm2099, %v2093, %v2110
  %v2112 = vsel %vm2098, %v2109, %v2111
  %v2113 = vshll.u32 %v2073, 8
  %v2114 = vmul.u32.u64.compose %v2113, %v2112
  %v2115 = vextract.low.u32 %v2114
  %v2116 = vextract.high.u32 %v2114
  %v2117 = vmul.u32.u64.compose %v2113, %v2108
  %v2118 = vextract.low.u32 %v2117
  %v2119 = vextract.high.u32 %v2117
  %v2120 = vmul.u32 %v2113, %v2104
  %v2121 = vadd.s32 %v2116, %v2118
  %vm2122 = vc.u32 %v2116, %v2118
  %v2123 = vadd.s32 %v2119, 1
  %v2124 = vsel %vm2122, %v2123, %v2119
  %v2125 = vadd.s32 %v2120, %v2124
  %v2126 = vadd.s32 %v2125, 536870912
  %v2127 = vshrl.u32 %v2126, 30
  %v2128 = vshll.u32 %v2127, 30
  %v2129 = vsub.s32 %v2125, %v2128
  %vm2130 = vcmp.lt.s32.totalorder %v2129, 0
  %v2131 = vsub.s32 0, %v2129
  %v2132 = vsel %vm2130, %v2131, %v2129
  %v2133 = vclz %v2132
  %v2134 = vsub.s32 %v2133, 2
  %vm2135 = vcmp.gt.s32.totalorder 0, %v2134
  %v2136 = vsel %vm2135, 0, %v2134
  %v2137 = vsub.s32 32, %v2136
  %v2138 = vshll.u32 %v2129, %v2136
  %v2139 = vshrl.u32 %v2121, %v2137
  %v2140 = vor.u32 %v2138, %v2139
  %v2141 = vsub.s32 4294967266, %v2136
  %v2142 = vadd.s32 %v2141, 127
  %v2143 = vshll.u32 %v2142, 23
  %v2144 = vor.u32 4788187, %v2143
  %v2145 = vand.u32 2147483647, %v2144
  %v2147 = vcvt.s32.f32 %v2140
  %v2148 = vmul.f32 %v2147, %v2145
  %v2149 = vxor.u32 %v2148, 2147483648
  %v2150 = vsel %vm2067, %v2149, %v2148
  %v2151 = vsub.s32 4, %v2127
  %v2152 = vsel %vm2067, %v2151, %v2127
  %v2153 = vsel %vm2066, %v495, %v2150
  %v2154 = vsel %vm2066, 0, %v2152
  %v2155 = vcosq.f32.pop %v2153
  %v2156 = vsinq.f32.pop %v2153
  %vm2157 = vweird.f32 %v495
  %v2158 = vadd.s32 %v2154, 3
  %v2159 = vand.u32 %v2158, 3
  %vm2160 = vcmp.lt.s32.totalorder %v2159, 2
  %vm2161 = vcmp.eq.s32.totalorder %v2159, 0
  %v2162 = vxor.u32 %v2156, 2147483648
  %v2163 = vsel %vm2161, %v2155, %v2162
  %vm2164 = vcmp.eq.s32.totalorder %v2159, 2
  %v2165 = vxor.u32 %v2155, 2147483648
  %v2166 = vsel %vm2164, %v2165, %v2156
  %v2167 = vsel %vm2160, %v2163, %v2166
  %v2168 = vsel %vm2157, nan, %v2167
  %v2169 = vand.u32 2147483647, %v496
  %vm2170 = vcmp.le.f32.partialorder %v2169, 0.7853982
  %vm2171 = vcmp.lt.s32.totalorder %v496, 0
  %v2172 = vand.u32 %v496, 2139095040
  %v2173 = vshrl.u32 %v2172, 23
  %v2174 = vsub.s32 %v2173, 127
  %v2175 = vand.u32 2147483647, %v496
  %v2176 = vand.u32 %v2175, 8388607
  %v2177 = vor.u32 %v2176, 8388608
  %v2178 = vsub.s32 0, %v2177
  %v2179 = vadd.s32 %v2174, 1
  %vm2180 = vcmp.gt.s32.totalorder %v2179, 0
  %v2181 = vsel %vm2180, %v2179, 0
  %v2182 = vshrl.u32 %v2181, 5
  %v2183 = vand.u32 %v2181, 31
  %v2184 = vsub.s32 32, %v2183
  %v2185 = vshrl.u32 683565275, %v2184
  %v2186 = vshll.u32 683565275, %v2183
  %v2187 = vshrl.u32 2475754826, %v2184
  %v2188 = vor.u32 %v2186, %v2187
  %v2189 = vshll.u32 2475754826, %v2183
  %v2190 = vshrl.u32 2131351028, %v2184
  %v2191 = vor.u32 %v2189, %v2190
  %v2192 = vshll.u32 2131351028, %v2183
  %v2193 = vshrl.u32 2102212464, %v2184
  %v2194 = vor.u32 %v2192, %v2193
  %v2195 = vshll.u32 2102212464, %v2183
  %v2196 = vshrl.u32 920167782, %v2184
  %v2197 = vor.u32 %v2195, %v2196
  %v2198 = vshll.u32 920167782, %v2183
  %v2199 = vshrl.u32 1326507024, %v2184
  %v2200 = vor.u32 %v2198, %v2199
  %vm2201 = vcmp.lt.s32.totalorder %v2182, 1
  %vm2202 = vcmp.lt.s32.totalorder %v2182, 2
  %vm2203 = vcmp.lt.s32.totalorder %v2182, 3
  %vm2204 = vcmp.lt.s32.totalorder %v2182, 4
  %v2205 = vsel %vm2201, %v2185, %v2188
  %v2206 = vsel %vm2204, %v2194, 2102212464
  %v2207 = vsel %vm2203, %v2191, %v2206
  %v2208 = vsel %vm2202, %v2205, %v2207
  %v2209 = vsel %vm2201, %v2188, %v2191
  %v2210 = vsel %vm2204, %v2197, 920167782
  %v2211 = vsel %vm2203, %v2194, %v2210
  %v2212 = vsel %vm2202, %v2209, %v2211
  %v2213 = vsel %vm2201, %v2191, %v2194
  %v2214 = vsel %vm2204, %v2200, 1326507024
  %v2215 = vsel %vm2203, %v2197, %v2214
  %v2216 = vsel %vm2202, %v2213, %v2215
  %v2217 = vshll.u32 %v2177, 8
  %v2218 = vmul.u32.u64.compose %v2217, %v2216
  %v2219 = vextract.low.u32 %v2218
  %v2220 = vextract.high.u32 %v2218
  %v2221 = vmul.u32.u64.compose %v2217, %v2212
  %v2222 = vextract.low.u32 %v2221
  %v2223 = vextract.high.u32 %v2221
  %v2224 = vmul.u32 %v2217, %v2208
  %v2225 = vadd.s32 %v2220, %v2222
  %vm2226 = vc.u32 %v2220, %v2222
  %v2227 = vadd.s32 %v2223, 1
  %v2228 = vsel %vm2226, %v2227, %v2223
  %v2229 = vadd.s32 %v2224, %v2228
  %v2230 = vadd.s32 %v2229, 536870912
  %v2231 = vshrl.u32 %v2230, 30
  %v2232 = vshll.u32 %v2231, 30
  %v2233 = vsub.s32 %v2229, %v2232
  %vm2234 = vcmp.lt.s32.totalorder %v2233, 0
  %v2235 = vsub.s32 0, %v2233
  %v2236 = vsel %vm2234, %v2235, %v2233
  %v2237 = vclz %v2236
  %v2238 = vsub.s32 %v2237, 2
  %vm2239 = vcmp.gt.s32.totalorder 0, %v2238
  %v2240 = vsel %vm2239, 0, %v2238
  %v2241 = vsub.s32 32, %v2240
  %v2242 = vshll.u32 %v2233, %v2240
  %v2243 = vshrl.u32 %v2225, %v2241
  %v2244 = vor.u32 %v2242, %v2243
  %v2245 = vsub.s32 4294967266, %v2240
  %v2246 = vadd.s32 %v2245, 127
  %v2247 = vshll.u32 %v2246, 23
  %v2248 = vor.u32 4788187, %v2247
  %v2249 = vand.u32 2147483647, %v2248
  %v2251 = vcvt.s32.f32 %v2244
  %v2252 = vmul.f32 %v2251, %v2249
  %v2253 = vxor.u32 %v2252, 2147483648
  %v2254 = vsel %vm2171, %v2253, %v2252
  %v2255 = vsub.s32 4, %v2231
  %v2256 = vsel %vm2171, %v2255, %v2231
  %v2257 = vsel %vm2170, %v496, %v2254
  %v2258 = vsel %vm2170, 0, %v2256
  %v2259 = vcosq.f32.pop %v2257
  %v2260 = vsinq.f32.pop %v2257
  %vm2261 = vweird.f32 %v496
  %v2262 = vadd.s32 %v2258, 3
  %v2263 = vand.u32 %v2262, 3
  %vm2264 = vcmp.lt.s32.totalorder %v2263, 2
  %vm2265 = vcmp.eq.s32.totalorder %v2263, 0
  %v2266 = vxor.u32 %v2260, 2147483648
  %v2267 = vsel %vm2265, %v2259, %v2266
  %vm2268 = vcmp.eq.s32.totalorder %v2263, 2
  %v2269 = vxor.u32 %v2259, 2147483648
  %v2270 = vsel %vm2268, %v2269, %v2260
  %v2271 = vsel %vm2264, %v2267, %v2270
  %v2272 = vsel %vm2261, nan, %v2271
  %v2273 = vand.u32 2147483647, %v497
  %vm2274 = vcmp.le.f32.partialorder %v2273, 0.7853982
  %vm2275 = vcmp.lt.s32.totalorder %v497, 0
  %v2276 = vand.u32 %v497, 2139095040
  %v2277 = vshrl.u32 %v2276, 23
  %v2278 = vsub.s32 %v2277, 127
  %v2279 = vand.u32 2147483647, %v497
  %v2280 = vand.u32 %v2279, 8388607
  %v2281 = vor.u32 %v2280, 8388608
  %v2282 = vsub.s32 0, %v2281
  %v2283 = vadd.s32 %v2278, 1
  %vm2284 = vcmp.gt.s32.totalorder %v2283, 0
  %v2285 = vsel %vm2284, %v2283, 0
  %v2286 = vshrl.u32 %v2285, 5
  %v2287 = vand.u32 %v2285, 31
  %v2288 = vsub.s32 32, %v2287
  %v2289 = vshrl.u32 683565275, %v2288
  %v2290 = vshll.u32 683565275, %v2287
  %v2291 = vshrl.u32 2475754826, %v2288
  %v2292 = vor.u32 %v2290, %v2291
  %v2293 = vshll.u32 2475754826, %v2287
  %v2294 = vshrl.u32 2131351028, %v2288
  %v2295 = vor.u32 %v2293, %v2294
  %v2296 = vshll.u32 2131351028, %v2287
  %v2297 = vshrl.u32 2102212464, %v2288
  %v2298 = vor.u32 %v2296, %v2297
  %v2299 = vshll.u32 2102212464, %v2287
  %v2300 = vshrl.u32 920167782, %v2288
  %v2301 = vor.u32 %v2299, %v2300
  %v2302 = vshll.u32 920167782, %v2287
  %v2303 = vshrl.u32 1326507024, %v2288
  %v2304 = vor.u32 %v2302, %v2303
  %vm2305 = vcmp.lt.s32.totalorder %v2286, 1
  %vm2306 = vcmp.lt.s32.totalorder %v2286, 2
  %vm2307 = vcmp.lt.s32.totalorder %v2286, 3
  %vm2308 = vcmp.lt.s32.totalorder %v2286, 4
  %v2309 = vsel %vm2305, %v2289, %v2292
  %v2310 = vsel %vm2308, %v2298, 2102212464
  %v2311 = vsel %vm2307, %v2295, %v2310
  %v2312 = vsel %vm2306, %v2309, %v2311
  %v2313 = vsel %vm2305, %v2292, %v2295
  %v2314 = vsel %vm2308, %v2301, 920167782
  %v2315 = vsel %vm2307, %v2298, %v2314
  %v2316 = vsel %vm2306, %v2313, %v2315
  %v2317 = vsel %vm2305, %v2295, %v2298
  %v2318 = vsel %vm2308, %v2304, 1326507024
  %v2319 = vsel %vm2307, %v2301, %v2318
  %v2320 = vsel %vm2306, %v2317, %v2319
  %v2321 = vshll.u32 %v2281, 8
  %v2322 = vmul.u32.u64.compose %v2321, %v2320
  %v2323 = vextract.low.u32 %v2322
  %v2324 = vextract.high.u32 %v2322
  %v2325 = vmul.u32.u64.compose %v2321, %v2316
  %v2326 = vextract.low.u32 %v2325
  %v2327 = vextract.high.u32 %v2325
  %v2328 = vmul.u32 %v2321, %v2312
  %v2329 = vadd.s32 %v2324, %v2326
  %vm2330 = vc.u32 %v2324, %v2326
  %v2331 = vadd.s32 %v2327, 1
  %v2332 = vsel %vm2330, %v2331, %v2327
  %v2333 = vadd.s32 %v2328, %v2332
  %v2334 = vadd.s32 %v2333, 536870912
  %v2335 = vshrl.u32 %v2334, 30
  %v2336 = vshll.u32 %v2335, 30
  %v2337 = vsub.s32 %v2333, %v2336
  %vm2338 = vcmp.lt.s32.totalorder %v2337, 0
  %v2339 = vsub.s32 0, %v2337
  %v2340 = vsel %vm2338, %v2339, %v2337
  %v2341 = vclz %v2340
  %v2342 = vsub.s32 %v2341, 2
  %vm2343 = vcmp.gt.s32.totalorder 0, %v2342
  %v2344 = vsel %vm2343, 0, %v2342
  %v2345 = vsub.s32 32, %v2344
  %v2346 = vshll.u32 %v2337, %v2344
  %v2347 = vshrl.u32 %v2329, %v2345
  %v2348 = vor.u32 %v2346, %v2347
  %v2349 = vsub.s32 4294967266, %v2344
  %v2350 = vadd.s32 %v2349, 127
  %v2351 = vshll.u32 %v2350, 23
  %v2352 = vor.u32 4788187, %v2351
  %v2353 = vand.u32 2147483647, %v2352
  %v2355 = vcvt.s32.f32 %v2348
  %v2356 = vmul.f32 %v2355, %v2353
  %v2357 = vxor.u32 %v2356, 2147483648
  %v2358 = vsel %vm2275, %v2357, %v2356
  %v2359 = vsub.s32 4, %v2335
  %v2360 = vsel %vm2275, %v2359, %v2335
  %v2361 = vsel %vm2274, %v497, %v2358
  %v2362 = vsel %vm2274, 0, %v2360
  %v2363 = vcosq.f32.pop %v2361
  %v2364 = vsinq.f32.pop %v2361
  %vm2365 = vweird.f32 %v497
  %v2366 = vadd.s32 %v2362, 3
  %v2367 = vand.u32 %v2366, 3
  %vm2368 = vcmp.lt.s32.totalorder %v2367, 2
  %vm2369 = vcmp.eq.s32.totalorder %v2367, 0
  %v2370 = vxor.u32 %v2364, 2147483648
  %v2371 = vsel %vm2369, %v2363, %v2370
  %vm2372 = vcmp.eq.s32.totalorder %v2367, 2
  %v2373 = vxor.u32 %v2363, 2147483648
  %v2374 = vsel %vm2372, %v2373, %v2364
  %v2375 = vsel %vm2368, %v2371, %v2374
  %v2376 = vsel %vm2365, nan, %v2375
  %v2377 = vand.u32 2147483647, %v498
  %vm2378 = vcmp.le.f32.partialorder %v2377, 0.7853982
  %vm2379 = vcmp.lt.s32.totalorder %v498, 0
  %v2380 = vand.u32 %v498, 2139095040
  %v2381 = vshrl.u32 %v2380, 23
  %v2382 = vsub.s32 %v2381, 127
  %v2383 = vand.u32 2147483647, %v498
  %v2384 = vand.u32 %v2383, 8388607
  %v2385 = vor.u32 %v2384, 8388608
  %v2386 = vsub.s32 0, %v2385
  %v2387 = vadd.s32 %v2382, 1
  %vm2388 = vcmp.gt.s32.totalorder %v2387, 0
  %v2389 = vsel %vm2388, %v2387, 0
  %v2390 = vshrl.u32 %v2389, 5
  %v2391 = vand.u32 %v2389, 31
  %v2392 = vsub.s32 32, %v2391
  %v2393 = vshrl.u32 683565275, %v2392
  %v2394 = vshll.u32 683565275, %v2391
  %v2395 = vshrl.u32 2475754826, %v2392
  %v2396 = vor.u32 %v2394, %v2395
  %v2397 = vshll.u32 2475754826, %v2391
  %v2398 = vshrl.u32 2131351028, %v2392
  %v2399 = vor.u32 %v2397, %v2398
  %v2400 = vshll.u32 2131351028, %v2391
  %v2401 = vshrl.u32 2102212464, %v2392
  %v2402 = vor.u32 %v2400, %v2401
  %v2403 = vshll.u32 2102212464, %v2391
  %v2404 = vshrl.u32 920167782, %v2392
  %v2405 = vor.u32 %v2403, %v2404
  %v2406 = vshll.u32 920167782, %v2391
  %v2407 = vshrl.u32 1326507024, %v2392
  %v2408 = vor.u32 %v2406, %v2407
  %vm2409 = vcmp.lt.s32.totalorder %v2390, 1
  %vm2410 = vcmp.lt.s32.totalorder %v2390, 2
  %vm2411 = vcmp.lt.s32.totalorder %v2390, 3
  %vm2412 = vcmp.lt.s32.totalorder %v2390, 4
  %v2413 = vsel %vm2409, %v2393, %v2396
  %v2414 = vsel %vm2412, %v2402, 2102212464
  %v2415 = vsel %vm2411, %v2399, %v2414
  %v2416 = vsel %vm2410, %v2413, %v2415
  %v2417 = vsel %vm2409, %v2396, %v2399
  %v2418 = vsel %vm2412, %v2405, 920167782
  %v2419 = vsel %vm2411, %v2402, %v2418
  %v2420 = vsel %vm2410, %v2417, %v2419
  %v2421 = vsel %vm2409, %v2399, %v2402
  %v2422 = vsel %vm2412, %v2408, 1326507024
  %v2423 = vsel %vm2411, %v2405, %v2422
  %v2424 = vsel %vm2410, %v2421, %v2423
  %v2425 = vshll.u32 %v2385, 8
  %v2426 = vmul.u32.u64.compose %v2425, %v2424
  %v2427 = vextract.low.u32 %v2426
  %v2428 = vextract.high.u32 %v2426
  %v2429 = vmul.u32.u64.compose %v2425, %v2420
  %v2430 = vextract.low.u32 %v2429
  %v2431 = vextract.high.u32 %v2429
  %v2432 = vmul.u32 %v2425, %v2416
  %v2433 = vadd.s32 %v2428, %v2430
  %vm2434 = vc.u32 %v2428, %v2430
  %v2435 = vadd.s32 %v2431, 1
  %v2436 = vsel %vm2434, %v2435, %v2431
  %v2437 = vadd.s32 %v2432, %v2436
  %v2438 = vadd.s32 %v2437, 536870912
  %v2439 = vshrl.u32 %v2438, 30
  %v2440 = vshll.u32 %v2439, 30
  %v2441 = vsub.s32 %v2437, %v2440
  %vm2442 = vcmp.lt.s32.totalorder %v2441, 0
  %v2443 = vsub.s32 0, %v2441
  %v2444 = vsel %vm2442, %v2443, %v2441
  %v2445 = vclz %v2444
  %v2446 = vsub.s32 %v2445, 2
  %vm2447 = vcmp.gt.s32.totalorder 0, %v2446
  %v2448 = vsel %vm2447, 0, %v2446
  %v2449 = vsub.s32 32, %v2448
  %v2450 = vshll.u32 %v2441, %v2448
  %v2451 = vshrl.u32 %v2433, %v2449
  %v2452 = vor.u32 %v2450, %v2451
  %v2453 = vsub.s32 4294967266, %v2448
  %v2454 = vadd.s32 %v2453, 127
  %v2455 = vshll.u32 %v2454, 23
  %v2456 = vor.u32 4788187, %v2455
  %v2457 = vand.u32 2147483647, %v2456
  %v2459 = vcvt.s32.f32 %v2452
  %v2460 = vmul.f32 %v2459, %v2457
  %v2461 = vxor.u32 %v2460, 2147483648
  %v2462 = vsel %vm2379, %v2461, %v2460
  %v2463 = vsub.s32 4, %v2439
  %v2464 = vsel %vm2379, %v2463, %v2439
  %v2465 = vsel %vm2378, %v498, %v2462
  %v2466 = vsel %vm2378, 0, %v2464
  %v2467 = vcosq.f32.pop %v2465
  %v2468 = vsinq.f32.pop %v2465
  %vm2469 = vweird.f32 %v498
  %v2470 = vadd.s32 %v2466, 3
  %v2471 = vand.u32 %v2470, 3
  %vm2472 = vcmp.lt.s32.totalorder %v2471, 2
  %vm2473 = vcmp.eq.s32.totalorder %v2471, 0
  %v2474 = vxor.u32 %v2468, 2147483648
  %v2475 = vsel %vm2473, %v2467, %v2474
  %vm2476 = vcmp.eq.s32.totalorder %v2471, 2
  %v2477 = vxor.u32 %v2467, 2147483648
  %v2478 = vsel %vm2476, %v2477, %v2468
  %v2479 = vsel %vm2472, %v2475, %v2478
  %v2480 = vsel %vm2469, nan, %v2479
  %v2481 = vand.u32 2147483647, %v499
  %vm2482 = vcmp.le.f32.partialorder %v2481, 0.7853982
  %vm2483 = vcmp.lt.s32.totalorder %v499, 0
  %v2484 = vand.u32 %v499, 2139095040
  %v2485 = vshrl.u32 %v2484, 23
  %v2486 = vsub.s32 %v2485, 127
  %v2487 = vand.u32 2147483647, %v499
  %v2488 = vand.u32 %v2487, 8388607
  %v2489 = vor.u32 %v2488, 8388608
  %v2490 = vsub.s32 0, %v2489
  %v2491 = vadd.s32 %v2486, 1
  %vm2492 = vcmp.gt.s32.totalorder %v2491, 0
  %v2493 = vsel %vm2492, %v2491, 0
  %v2494 = vshrl.u32 %v2493, 5
  %v2495 = vand.u32 %v2493, 31
  %v2496 = vsub.s32 32, %v2495
  %v2497 = vshrl.u32 683565275, %v2496
  %v2498 = vshll.u32 683565275, %v2495
  %v2499 = vshrl.u32 2475754826, %v2496
  %v2500 = vor.u32 %v2498, %v2499
  %v2501 = vshll.u32 2475754826, %v2495
  %v2502 = vshrl.u32 2131351028, %v2496
  %v2503 = vor.u32 %v2501, %v2502
  %v2504 = vshll.u32 2131351028, %v2495
  %v2505 = vshrl.u32 2102212464, %v2496
  %v2506 = vor.u32 %v2504, %v2505
  %v2507 = vshll.u32 2102212464, %v2495
  %v2508 = vshrl.u32 920167782, %v2496
  %v2509 = vor.u32 %v2507, %v2508
  %v2510 = vshll.u32 920167782, %v2495
  %v2511 = vshrl.u32 1326507024, %v2496
  %v2512 = vor.u32 %v2510, %v2511
  %vm2513 = vcmp.lt.s32.totalorder %v2494, 1
  %vm2514 = vcmp.lt.s32.totalorder %v2494, 2
  %vm2515 = vcmp.lt.s32.totalorder %v2494, 3
  %vm2516 = vcmp.lt.s32.totalorder %v2494, 4
  %v2517 = vsel %vm2513, %v2497, %v2500
  %v2518 = vsel %vm2516, %v2506, 2102212464
  %v2519 = vsel %vm2515, %v2503, %v2518
  %v2520 = vsel %vm2514, %v2517, %v2519
  %v2521 = vsel %vm2513, %v2500, %v2503
  %v2522 = vsel %vm2516, %v2509, 920167782
  %v2523 = vsel %vm2515, %v2506, %v2522
  %v2524 = vsel %vm2514, %v2521, %v2523
  %v2525 = vsel %vm2513, %v2503, %v2506
  %v2526 = vsel %vm2516, %v2512, 1326507024
  %v2527 = vsel %vm2515, %v2509, %v2526
  %v2528 = vsel %vm2514, %v2525, %v2527
  %v2529 = vshll.u32 %v2489, 8
  %v2530 = vmul.u32.u64.compose %v2529, %v2528
  %v2531 = vextract.low.u32 %v2530
  %v2532 = vextract.high.u32 %v2530
  %v2533 = vmul.u32.u64.compose %v2529, %v2524
  %v2534 = vextract.low.u32 %v2533
  %v2535 = vextract.high.u32 %v2533
  %v2536 = vmul.u32 %v2529, %v2520
  %v2537 = vadd.s32 %v2532, %v2534
  %vm2538 = vc.u32 %v2532, %v2534
  %v2539 = vadd.s32 %v2535, 1
  %v2540 = vsel %vm2538, %v2539, %v2535
  %v2541 = vadd.s32 %v2536, %v2540
  %v2542 = vadd.s32 %v2541, 536870912
  %v2543 = vshrl.u32 %v2542, 30
  %v2544 = vshll.u32 %v2543, 30
  %v2545 = vsub.s32 %v2541, %v2544
  %vm2546 = vcmp.lt.s32.totalorder %v2545, 0
  %v2547 = vsub.s32 0, %v2545
  %v2548 = vsel %vm2546, %v2547, %v2545
  %v2549 = vclz %v2548
  %v2550 = vsub.s32 %v2549, 2
  %vm2551 = vcmp.gt.s32.totalorder 0, %v2550
  %v2552 = vsel %vm2551, 0, %v2550
  %v2553 = vsub.s32 32, %v2552
  %v2554 = vshll.u32 %v2545, %v2552
  %v2555 = vshrl.u32 %v2537, %v2553
  %v2556 = vor.u32 %v2554, %v2555
  %v2557 = vsub.s32 4294967266, %v2552
  %v2558 = vadd.s32 %v2557, 127
  %v2559 = vshll.u32 %v2558, 23
  %v2560 = vor.u32 4788187, %v2559
  %v2561 = vand.u32 2147483647, %v2560
  %v2563 = vcvt.s32.f32 %v2556
  %v2564 = vmul.f32 %v2563, %v2561
  %v2565 = vxor.u32 %v2564, 2147483648
  %v2566 = vsel %vm2483, %v2565, %v2564
  %v2567 = vsub.s32 4, %v2543
  %v2568 = vsel %vm2483, %v2567, %v2543
  %v2569 = vsel %vm2482, %v499, %v2566
  %v2570 = vsel %vm2482, 0, %v2568
  %v2571 = vcosq.f32.pop %v2569
  %v2572 = vsinq.f32.pop %v2569
  %vm2573 = vweird.f32 %v499
  %v2574 = vadd.s32 %v2570, 3
  %v2575 = vand.u32 %v2574, 3
  %vm2576 = vcmp.lt.s32.totalorder %v2575, 2
  %vm2577 = vcmp.eq.s32.totalorder %v2575, 0
  %v2578 = vxor.u32 %v2572, 2147483648
  %v2579 = vsel %vm2577, %v2571, %v2578
  %vm2580 = vcmp.eq.s32.totalorder %v2575, 2
  %v2581 = vxor.u32 %v2571, 2147483648
  %v2582 = vsel %vm2580, %v2581, %v2572
  %v2583 = vsel %vm2576, %v2579, %v2582
  %v2584 = vsel %vm2573, nan, %v2583
  %v2585 = vand.u32 2147483647, %v500
  %vm2586 = vcmp.le.f32.partialorder %v2585, 0.7853982
  %vm2587 = vcmp.lt.s32.totalorder %v500, 0
  %v2588 = vand.u32 %v500, 2139095040
  %v2589 = vshrl.u32 %v2588, 23
  %v2590 = vsub.s32 %v2589, 127
  %v2591 = vand.u32 2147483647, %v500
  %v2592 = vand.u32 %v2591, 8388607
  %v2593 = vor.u32 %v2592, 8388608
  %v2594 = vsub.s32 0, %v2593
  %v2595 = vadd.s32 %v2590, 1
  %vm2596 = vcmp.gt.s32.totalorder %v2595, 0
  %v2597 = vsel %vm2596, %v2595, 0
  %v2598 = vshrl.u32 %v2597, 5
  %v2599 = vand.u32 %v2597, 31
  %v2600 = vsub.s32 32, %v2599
  %v2601 = vshrl.u32 683565275, %v2600
  %v2602 = vshll.u32 683565275, %v2599
  %v2603 = vshrl.u32 2475754826, %v2600
  %v2604 = vor.u32 %v2602, %v2603
  %v2605 = vshll.u32 2475754826, %v2599
  %v2606 = vshrl.u32 2131351028, %v2600
  %v2607 = vor.u32 %v2605, %v2606
  %v2608 = vshll.u32 2131351028, %v2599
  %v2609 = vshrl.u32 2102212464, %v2600
  %v2610 = vor.u32 %v2608, %v2609
  %v2611 = vshll.u32 2102212464, %v2599
  %v2612 = vshrl.u32 920167782, %v2600
  %v2613 = vor.u32 %v2611, %v2612
  %v2614 = vshll.u32 920167782, %v2599
  %v2615 = vshrl.u32 1326507024, %v2600
  %v2616 = vor.u32 %v2614, %v2615
  %vm2617 = vcmp.lt.s32.totalorder %v2598, 1
  %vm2618 = vcmp.lt.s32.totalorder %v2598, 2
  %vm2619 = vcmp.lt.s32.totalorder %v2598, 3
  %vm2620 = vcmp.lt.s32.totalorder %v2598, 4
  %v2621 = vsel %vm2617, %v2601, %v2604
  %v2622 = vsel %vm2620, %v2610, 2102212464
  %v2623 = vsel %vm2619, %v2607, %v2622
  %v2624 = vsel %vm2618, %v2621, %v2623
  %v2625 = vsel %vm2617, %v2604, %v2607
  %v2626 = vsel %vm2620, %v2613, 920167782
  %v2627 = vsel %vm2619, %v2610, %v2626
  %v2628 = vsel %vm2618, %v2625, %v2627
  %v2629 = vsel %vm2617, %v2607, %v2610
  %v2630 = vsel %vm2620, %v2616, 1326507024
  %v2631 = vsel %vm2619, %v2613, %v2630
  %v2632 = vsel %vm2618, %v2629, %v2631
  %v2633 = vshll.u32 %v2593, 8
  %v2634 = vmul.u32.u64.compose %v2633, %v2632
  %v2635 = vextract.low.u32 %v2634
  %v2636 = vextract.high.u32 %v2634
  %v2637 = vmul.u32.u64.compose %v2633, %v2628
  %v2638 = vextract.low.u32 %v2637
  %v2639 = vextract.high.u32 %v2637
  %v2640 = vmul.u32 %v2633, %v2624
  %v2641 = vadd.s32 %v2636, %v2638
  %vm2642 = vc.u32 %v2636, %v2638
  %v2643 = vadd.s32 %v2639, 1
  %v2644 = vsel %vm2642, %v2643, %v2639
  %v2645 = vadd.s32 %v2640, %v2644
  %v2646 = vadd.s32 %v2645, 536870912
  %v2647 = vshrl.u32 %v2646, 30
  %v2648 = vshll.u32 %v2647, 30
  %v2649 = vsub.s32 %v2645, %v2648
  %vm2650 = vcmp.lt.s32.totalorder %v2649, 0
  %v2651 = vsub.s32 0, %v2649
  %v2652 = vsel %vm2650, %v2651, %v2649
  %v2653 = vclz %v2652
  %v2654 = vsub.s32 %v2653, 2
  %vm2655 = vcmp.gt.s32.totalorder 0, %v2654
  %v2656 = vsel %vm2655, 0, %v2654
  %v2657 = vsub.s32 32, %v2656
  %v2658 = vshll.u32 %v2649, %v2656
  %v2659 = vshrl.u32 %v2641, %v2657
  %v2660 = vor.u32 %v2658, %v2659
  %v2661 = vsub.s32 4294967266, %v2656
  %v2662 = vadd.s32 %v2661, 127
  %v2663 = vshll.u32 %v2662, 23
  %v2664 = vor.u32 4788187, %v2663
  %v2665 = vand.u32 2147483647, %v2664
  %v2667 = vcvt.s32.f32 %v2660
  %v2668 = vmul.f32 %v2667, %v2665
  %v2669 = vxor.u32 %v2668, 2147483648
  %v2670 = vsel %vm2587, %v2669, %v2668
  %v2671 = vsub.s32 4, %v2647
  %v2672 = vsel %vm2587, %v2671, %v2647
  %v2673 = vsel %vm2586, %v500, %v2670
  %v2674 = vsel %vm2586, 0, %v2672
  %v2675 = vcosq.f32.pop %v2673
  %v2676 = vsinq.f32.pop %v2673
  %vm2677 = vweird.f32 %v500
  %v2678 = vadd.s32 %v2674, 3
  %v2679 = vand.u32 %v2678, 3
  %vm2680 = vcmp.lt.s32.totalorder %v2679, 2
  %vm2681 = vcmp.eq.s32.totalorder %v2679, 0
  %v2682 = vxor.u32 %v2676, 2147483648
  %v2683 = vsel %vm2681, %v2675, %v2682
  %vm2684 = vcmp.eq.s32.totalorder %v2679, 2
  %v2685 = vxor.u32 %v2675, 2147483648
  %v2686 = vsel %vm2684, %v2685, %v2676
  %v2687 = vsel %vm2680, %v2683, %v2686
  %v2688 = vsel %vm2677, nan, %v2687
  %v2689 = vand.u32 2147483647, %v501
  %vm2690 = vcmp.le.f32.partialorder %v2689, 0.7853982
  %vm2691 = vcmp.lt.s32.totalorder %v501, 0
  %v2692 = vand.u32 %v501, 2139095040
  %v2693 = vshrl.u32 %v2692, 23
  %v2694 = vsub.s32 %v2693, 127
  %v2695 = vand.u32 2147483647, %v501
  %v2696 = vand.u32 %v2695, 8388607
  %v2697 = vor.u32 %v2696, 8388608
  %v2698 = vsub.s32 0, %v2697
  %v2699 = vadd.s32 %v2694, 1
  %vm2700 = vcmp.gt.s32.totalorder %v2699, 0
  %v2701 = vsel %vm2700, %v2699, 0
  %v2702 = vshrl.u32 %v2701, 5
  %v2703 = vand.u32 %v2701, 31
  %v2704 = vsub.s32 32, %v2703
  %v2705 = vshrl.u32 683565275, %v2704
  %v2706 = vshll.u32 683565275, %v2703
  %v2707 = vshrl.u32 2475754826, %v2704
  %v2708 = vor.u32 %v2706, %v2707
  %v2709 = vshll.u32 2475754826, %v2703
  %v2710 = vshrl.u32 2131351028, %v2704
  %v2711 = vor.u32 %v2709, %v2710
  %v2712 = vshll.u32 2131351028, %v2703
  %v2713 = vshrl.u32 2102212464, %v2704
  %v2714 = vor.u32 %v2712, %v2713
  %v2715 = vshll.u32 2102212464, %v2703
  %v2716 = vshrl.u32 920167782, %v2704
  %v2717 = vor.u32 %v2715, %v2716
  %v2718 = vshll.u32 920167782, %v2703
  %v2719 = vshrl.u32 1326507024, %v2704
  %v2720 = vor.u32 %v2718, %v2719
  %vm2721 = vcmp.lt.s32.totalorder %v2702, 1
  %vm2722 = vcmp.lt.s32.totalorder %v2702, 2
  %vm2723 = vcmp.lt.s32.totalorder %v2702, 3
  %vm2724 = vcmp.lt.s32.totalorder %v2702, 4
  %v2725 = vsel %vm2721, %v2705, %v2708
  %v2726 = vsel %vm2724, %v2714, 2102212464
  %v2727 = vsel %vm2723, %v2711, %v2726
  %v2728 = vsel %vm2722, %v2725, %v2727
  %v2729 = vsel %vm2721, %v2708, %v2711
  %v2730 = vsel %vm2724, %v2717, 920167782
  %v2731 = vsel %vm2723, %v2714, %v2730
  %v2732 = vsel %vm2722, %v2729, %v2731
  %v2733 = vsel %vm2721, %v2711, %v2714
  %v2734 = vsel %vm2724, %v2720, 1326507024
  %v2735 = vsel %vm2723, %v2717, %v2734
  %v2736 = vsel %vm2722, %v2733, %v2735
  %v2737 = vshll.u32 %v2697, 8
  %v2738 = vmul.u32.u64.compose %v2737, %v2736
  %v2739 = vextract.low.u32 %v2738
  %v2740 = vextract.high.u32 %v2738
  %v2741 = vmul.u32.u64.compose %v2737, %v2732
  %v2742 = vextract.low.u32 %v2741
  %v2743 = vextract.high.u32 %v2741
  %v2744 = vmul.u32 %v2737, %v2728
  %v2745 = vadd.s32 %v2740, %v2742
  %vm2746 = vc.u32 %v2740, %v2742
  %v2747 = vadd.s32 %v2743, 1
  %v2748 = vsel %vm2746, %v2747, %v2743
  %v2749 = vadd.s32 %v2744, %v2748
  %v2750 = vadd.s32 %v2749, 536870912
  %v2751 = vshrl.u32 %v2750, 30
  %v2752 = vshll.u32 %v2751, 30
  %v2753 = vsub.s32 %v2749, %v2752
  %vm2754 = vcmp.lt.s32.totalorder %v2753, 0
  %v2755 = vsub.s32 0, %v2753
  %v2756 = vsel %vm2754, %v2755, %v2753
  %v2757 = vclz %v2756
  %v2758 = vsub.s32 %v2757, 2
  %vm2759 = vcmp.gt.s32.totalorder 0, %v2758
  %v2760 = vsel %vm2759, 0, %v2758
  %v2761 = vsub.s32 32, %v2760
  %v2762 = vshll.u32 %v2753, %v2760
  %v2763 = vshrl.u32 %v2745, %v2761
  %v2764 = vor.u32 %v2762, %v2763
  %v2765 = vsub.s32 4294967266, %v2760
  %v2766 = vadd.s32 %v2765, 127
  %v2767 = vshll.u32 %v2766, 23
  %v2768 = vor.u32 4788187, %v2767
  %v2769 = vand.u32 2147483647, %v2768
  %v2771 = vcvt.s32.f32 %v2764
  %v2772 = vmul.f32 %v2771, %v2769
  %v2773 = vxor.u32 %v2772, 2147483648
  %v2774 = vsel %vm2691, %v2773, %v2772
  %v2775 = vsub.s32 4, %v2751
  %v2776 = vsel %vm2691, %v2775, %v2751
  %v2777 = vsel %vm2690, %v501, %v2774
  %v2778 = vsel %vm2690, 0, %v2776
  %v2779 = vcosq.f32.pop %v2777
  %v2780 = vsinq.f32.pop %v2777
  %vm2781 = vweird.f32 %v501
  %v2782 = vadd.s32 %v2778, 3
  %v2783 = vand.u32 %v2782, 3
  %vm2784 = vcmp.lt.s32.totalorder %v2783, 2
  %vm2785 = vcmp.eq.s32.totalorder %v2783, 0
  %v2786 = vxor.u32 %v2780, 2147483648
  %v2787 = vsel %vm2785, %v2779, %v2786
  %vm2788 = vcmp.eq.s32.totalorder %v2783, 2
  %v2789 = vxor.u32 %v2779, 2147483648
  %v2790 = vsel %vm2788, %v2789, %v2780
  %v2791 = vsel %vm2784, %v2787, %v2790
  %v2792 = vsel %vm2781, nan, %v2791
  %v2793 = vand.u32 2147483647, %v502
  %vm2794 = vcmp.le.f32.partialorder %v2793, 0.7853982
  %vm2795 = vcmp.lt.s32.totalorder %v502, 0
  %v2796 = vand.u32 %v502, 2139095040
  %v2797 = vshrl.u32 %v2796, 23
  %v2798 = vsub.s32 %v2797, 127
  %v2799 = vand.u32 2147483647, %v502
  %v2800 = vand.u32 %v2799, 8388607
  %v2801 = vor.u32 %v2800, 8388608
  %v2802 = vsub.s32 0, %v2801
  %v2803 = vadd.s32 %v2798, 1
  %vm2804 = vcmp.gt.s32.totalorder %v2803, 0
  %v2805 = vsel %vm2804, %v2803, 0
  %v2806 = vshrl.u32 %v2805, 5
  %v2807 = vand.u32 %v2805, 31
  %v2808 = vsub.s32 32, %v2807
  %v2809 = vshrl.u32 683565275, %v2808
  %v2810 = vshll.u32 683565275, %v2807
  %v2811 = vshrl.u32 2475754826, %v2808
  %v2812 = vor.u32 %v2810, %v2811
  %v2813 = vshll.u32 2475754826, %v2807
  %v2814 = vshrl.u32 2131351028, %v2808
  %v2815 = vor.u32 %v2813, %v2814
  %v2816 = vshll.u32 2131351028, %v2807
  %v2817 = vshrl.u32 2102212464, %v2808
  %v2818 = vor.u32 %v2816, %v2817
  %v2819 = vshll.u32 2102212464, %v2807
  %v2820 = vshrl.u32 920167782, %v2808
  %v2821 = vor.u32 %v2819, %v2820
  %v2822 = vshll.u32 920167782, %v2807
  %v2823 = vshrl.u32 1326507024, %v2808
  %v2824 = vor.u32 %v2822, %v2823
  %vm2825 = vcmp.lt.s32.totalorder %v2806, 1
  %vm2826 = vcmp.lt.s32.totalorder %v2806, 2
  %vm2827 = vcmp.lt.s32.totalorder %v2806, 3
  %vm2828 = vcmp.lt.s32.totalorder %v2806, 4
  %v2829 = vsel %vm2825, %v2809, %v2812
  %v2830 = vsel %vm2828, %v2818, 2102212464
  %v2831 = vsel %vm2827, %v2815, %v2830
  %v2832 = vsel %vm2826, %v2829, %v2831
  %v2833 = vsel %vm2825, %v2812, %v2815
  %v2834 = vsel %vm2828, %v2821, 920167782
  %v2835 = vsel %vm2827, %v2818, %v2834
  %v2836 = vsel %vm2826, %v2833, %v2835
  %v2837 = vsel %vm2825, %v2815, %v2818
  %v2838 = vsel %vm2828, %v2824, 1326507024
  %v2839 = vsel %vm2827, %v2821, %v2838
  %v2840 = vsel %vm2826, %v2837, %v2839
  %v2841 = vshll.u32 %v2801, 8
  %v2842 = vmul.u32.u64.compose %v2841, %v2840
  %v2843 = vextract.low.u32 %v2842
  %v2844 = vextract.high.u32 %v2842
  %v2845 = vmul.u32.u64.compose %v2841, %v2836
  %v2846 = vextract.low.u32 %v2845
  %v2847 = vextract.high.u32 %v2845
  %v2848 = vmul.u32 %v2841, %v2832
  %v2849 = vadd.s32 %v2844, %v2846
  %vm2850 = vc.u32 %v2844, %v2846
  %v2851 = vadd.s32 %v2847, 1
  %v2852 = vsel %vm2850, %v2851, %v2847
  %v2853 = vadd.s32 %v2848, %v2852
  %v2854 = vadd.s32 %v2853, 536870912
  %v2855 = vshrl.u32 %v2854, 30
  %v2856 = vshll.u32 %v2855, 30
  %v2857 = vsub.s32 %v2853, %v2856
  %vm2858 = vcmp.lt.s32.totalorder %v2857, 0
  %v2859 = vsub.s32 0, %v2857
  %v2860 = vsel %vm2858, %v2859, %v2857
  %v2861 = vclz %v2860
  %v2862 = vsub.s32 %v2861, 2
  %vm2863 = vcmp.gt.s32.totalorder 0, %v2862
  %v2864 = vsel %vm2863, 0, %v2862
  %v2865 = vsub.s32 32, %v2864
  %v2866 = vshll.u32 %v2857, %v2864
  %v2867 = vshrl.u32 %v2849, %v2865
  %v2868 = vor.u32 %v2866, %v2867
  %v2869 = vsub.s32 4294967266, %v2864
  %v2870 = vadd.s32 %v2869, 127
  %v2871 = vshll.u32 %v2870, 23
  %v2872 = vor.u32 4788187, %v2871
  %v2873 = vand.u32 2147483647, %v2872
  %v2875 = vcvt.s32.f32 %v2868
  %v2876 = vmul.f32 %v2875, %v2873
  %v2877 = vxor.u32 %v2876, 2147483648
  %v2878 = vsel %vm2795, %v2877, %v2876
  %v2879 = vsub.s32 4, %v2855
  %v2880 = vsel %vm2795, %v2879, %v2855
  %v2881 = vsel %vm2794, %v502, %v2878
  %v2882 = vsel %vm2794, 0, %v2880
  %v2883 = vcosq.f32.pop %v2881
  %v2884 = vsinq.f32.pop %v2881
  %vm2885 = vweird.f32 %v502
  %v2886 = vadd.s32 %v2882, 3
  %v2887 = vand.u32 %v2886, 3
  %vm2888 = vcmp.lt.s32.totalorder %v2887, 2
  %vm2889 = vcmp.eq.s32.totalorder %v2887, 0
  %v2890 = vxor.u32 %v2884, 2147483648
  %v2891 = vsel %vm2889, %v2883, %v2890
  %vm2892 = vcmp.eq.s32.totalorder %v2887, 2
  %v2893 = vxor.u32 %v2883, 2147483648
  %v2894 = vsel %vm2892, %v2893, %v2884
  %v2895 = vsel %vm2888, %v2891, %v2894
  %v2896 = vsel %vm2885, nan, %v2895
  %v2897 = vand.u32 2147483647, %v503
  %vm2898 = vcmp.le.f32.partialorder %v2897, 0.7853982
  %vm2899 = vcmp.lt.s32.totalorder %v503, 0
  %v2900 = vand.u32 %v503, 2139095040
  %v2901 = vshrl.u32 %v2900, 23
  %v2902 = vsub.s32 %v2901, 127
  %v2903 = vand.u32 2147483647, %v503
  %v2904 = vand.u32 %v2903, 8388607
  %v2905 = vor.u32 %v2904, 8388608
  %v2906 = vsub.s32 0, %v2905
  %v2907 = vadd.s32 %v2902, 1
  %vm2908 = vcmp.gt.s32.totalorder %v2907, 0
  %v2909 = vsel %vm2908, %v2907, 0
  %v2910 = vshrl.u32 %v2909, 5
  %v2911 = vand.u32 %v2909, 31
  %v2912 = vsub.s32 32, %v2911
  %v2913 = vshrl.u32 683565275, %v2912
  %v2914 = vshll.u32 683565275, %v2911
  %v2915 = vshrl.u32 2475754826, %v2912
  %v2916 = vor.u32 %v2914, %v2915
  %v2917 = vshll.u32 2475754826, %v2911
  %v2918 = vshrl.u32 2131351028, %v2912
  %v2919 = vor.u32 %v2917, %v2918
  %v2920 = vshll.u32 2131351028, %v2911
  %v2921 = vshrl.u32 2102212464, %v2912
  %v2922 = vor.u32 %v2920, %v2921
  %v2923 = vshll.u32 2102212464, %v2911
  %v2924 = vshrl.u32 920167782, %v2912
  %v2925 = vor.u32 %v2923, %v2924
  %v2926 = vshll.u32 920167782, %v2911
  %v2927 = vshrl.u32 1326507024, %v2912
  %v2928 = vor.u32 %v2926, %v2927
  %vm2929 = vcmp.lt.s32.totalorder %v2910, 1
  %vm2930 = vcmp.lt.s32.totalorder %v2910, 2
  %vm2931 = vcmp.lt.s32.totalorder %v2910, 3
  %vm2932 = vcmp.lt.s32.totalorder %v2910, 4
  %v2933 = vsel %vm2929, %v2913, %v2916
  %v2934 = vsel %vm2932, %v2922, 2102212464
  %v2935 = vsel %vm2931, %v2919, %v2934
  %v2936 = vsel %vm2930, %v2933, %v2935
  %v2937 = vsel %vm2929, %v2916, %v2919
  %v2938 = vsel %vm2932, %v2925, 920167782
  %v2939 = vsel %vm2931, %v2922, %v2938
  %v2940 = vsel %vm2930, %v2937, %v2939
  %v2941 = vsel %vm2929, %v2919, %v2922
  %v2942 = vsel %vm2932, %v2928, 1326507024
  %v2943 = vsel %vm2931, %v2925, %v2942
  %v2944 = vsel %vm2930, %v2941, %v2943
  %v2945 = vshll.u32 %v2905, 8
  %v2946 = vmul.u32.u64.compose %v2945, %v2944
  %v2947 = vextract.low.u32 %v2946
  %v2948 = vextract.high.u32 %v2946
  %v2949 = vmul.u32.u64.compose %v2945, %v2940
  %v2950 = vextract.low.u32 %v2949
  %v2951 = vextract.high.u32 %v2949
  %v2952 = vmul.u32 %v2945, %v2936
  %v2953 = vadd.s32 %v2948, %v2950
  %vm2954 = vc.u32 %v2948, %v2950
  %v2955 = vadd.s32 %v2951, 1
  %v2956 = vsel %vm2954, %v2955, %v2951
  %v2957 = vadd.s32 %v2952, %v2956
  %v2958 = vadd.s32 %v2957, 536870912
  %v2959 = vshrl.u32 %v2958, 30
  %v2960 = vshll.u32 %v2959, 30
  %v2961 = vsub.s32 %v2957, %v2960
  %vm2962 = vcmp.lt.s32.totalorder %v2961, 0
  %v2963 = vsub.s32 0, %v2961
  %v2964 = vsel %vm2962, %v2963, %v2961
  %v2965 = vclz %v2964
  %v2966 = vsub.s32 %v2965, 2
  %vm2967 = vcmp.gt.s32.totalorder 0, %v2966
  %v2968 = vsel %vm2967, 0, %v2966
  %v2969 = vsub.s32 32, %v2968
  %v2970 = vshll.u32 %v2961, %v2968
  %v2971 = vshrl.u32 %v2953, %v2969
  %v2972 = vor.u32 %v2970, %v2971
  %v2973 = vsub.s32 4294967266, %v2968
  %v2974 = vadd.s32 %v2973, 127
  %v2975 = vshll.u32 %v2974, 23
  %v2976 = vor.u32 4788187, %v2975
  %v2977 = vand.u32 2147483647, %v2976
  %v2979 = vcvt.s32.f32 %v2972
  %v2980 = vmul.f32 %v2979, %v2977
  %v2981 = vxor.u32 %v2980, 2147483648
  %v2982 = vsel %vm2899, %v2981, %v2980
  %v2983 = vsub.s32 4, %v2959
  %v2984 = vsel %vm2899, %v2983, %v2959
  %v2985 = vsel %vm2898, %v503, %v2982
  %v2986 = vsel %vm2898, 0, %v2984
  %v2987 = vcosq.f32.pop %v2985
  %v2988 = vsinq.f32.pop %v2985
  %vm2989 = vweird.f32 %v503
  %v2990 = vadd.s32 %v2986, 3
  %v2991 = vand.u32 %v2990, 3
  %vm2992 = vcmp.lt.s32.totalorder %v2991, 2
  %vm2993 = vcmp.eq.s32.totalorder %v2991, 0
  %v2994 = vxor.u32 %v2988, 2147483648
  %v2995 = vsel %vm2993, %v2987, %v2994
  %vm2996 = vcmp.eq.s32.totalorder %v2991, 2
  %v2997 = vxor.u32 %v2987, 2147483648
  %v2998 = vsel %vm2996, %v2997, %v2988
  %v2999 = vsel %vm2992, %v2995, %v2998
  %v3000 = vsel %vm2989, nan, %v2999
  %v3001 = vand.u32 2147483647, %v504
  %vm3002 = vcmp.le.f32.partialorder %v3001, 0.7853982
  %vm3003 = vcmp.lt.s32.totalorder %v504, 0
  %v3004 = vand.u32 %v504, 2139095040
  %v3005 = vshrl.u32 %v3004, 23
  %v3006 = vsub.s32 %v3005, 127
  %v3007 = vand.u32 2147483647, %v504
  %v3008 = vand.u32 %v3007, 8388607
  %v3009 = vor.u32 %v3008, 8388608
  %v3010 = vsub.s32 0, %v3009
  %v3011 = vadd.s32 %v3006, 1
  %vm3012 = vcmp.gt.s32.totalorder %v3011, 0
  %v3013 = vsel %vm3012, %v3011, 0
  %v3014 = vshrl.u32 %v3013, 5
  %v3015 = vand.u32 %v3013, 31
  %v3016 = vsub.s32 32, %v3015
  %v3017 = vshrl.u32 683565275, %v3016
  %v3018 = vshll.u32 683565275, %v3015
  %v3019 = vshrl.u32 2475754826, %v3016
  %v3020 = vor.u32 %v3018, %v3019
  %v3021 = vshll.u32 2475754826, %v3015
  %v3022 = vshrl.u32 2131351028, %v3016
  %v3023 = vor.u32 %v3021, %v3022
  %v3024 = vshll.u32 2131351028, %v3015
  %v3025 = vshrl.u32 2102212464, %v3016
  %v3026 = vor.u32 %v3024, %v3025
  %v3027 = vshll.u32 2102212464, %v3015
  %v3028 = vshrl.u32 920167782, %v3016
  %v3029 = vor.u32 %v3027, %v3028
  %v3030 = vshll.u32 920167782, %v3015
  %v3031 = vshrl.u32 1326507024, %v3016
  %v3032 = vor.u32 %v3030, %v3031
  %vm3033 = vcmp.lt.s32.totalorder %v3014, 1
  %vm3034 = vcmp.lt.s32.totalorder %v3014, 2
  %vm3035 = vcmp.lt.s32.totalorder %v3014, 3
  %vm3036 = vcmp.lt.s32.totalorder %v3014, 4
  %v3037 = vsel %vm3033, %v3017, %v3020
  %v3038 = vsel %vm3036, %v3026, 2102212464
  %v3039 = vsel %vm3035, %v3023, %v3038
  %v3040 = vsel %vm3034, %v3037, %v3039
  %v3041 = vsel %vm3033, %v3020, %v3023
  %v3042 = vsel %vm3036, %v3029, 920167782
  %v3043 = vsel %vm3035, %v3026, %v3042
  %v3044 = vsel %vm3034, %v3041, %v3043
  %v3045 = vsel %vm3033, %v3023, %v3026
  %v3046 = vsel %vm3036, %v3032, 1326507024
  %v3047 = vsel %vm3035, %v3029, %v3046
  %v3048 = vsel %vm3034, %v3045, %v3047
  %v3049 = vshll.u32 %v3009, 8
  %v3050 = vmul.u32.u64.compose %v3049, %v3048
  %v3051 = vextract.low.u32 %v3050
  %v3052 = vextract.high.u32 %v3050
  %v3053 = vmul.u32.u64.compose %v3049, %v3044
  %v3054 = vextract.low.u32 %v3053
  %v3055 = vextract.high.u32 %v3053
  %v3056 = vmul.u32 %v3049, %v3040
  %v3057 = vadd.s32 %v3052, %v3054
  %vm3058 = vc.u32 %v3052, %v3054
  %v3059 = vadd.s32 %v3055, 1
  %v3060 = vsel %vm3058, %v3059, %v3055
  %v3061 = vadd.s32 %v3056, %v3060
  %v3062 = vadd.s32 %v3061, 536870912
  %v3063 = vshrl.u32 %v3062, 30
  %v3064 = vshll.u32 %v3063, 30
  %v3065 = vsub.s32 %v3061, %v3064
  %vm3066 = vcmp.lt.s32.totalorder %v3065, 0
  %v3067 = vsub.s32 0, %v3065
  %v3068 = vsel %vm3066, %v3067, %v3065
  %v3069 = vclz %v3068
  %v3070 = vsub.s32 %v3069, 2
  %vm3071 = vcmp.gt.s32.totalorder 0, %v3070
  %v3072 = vsel %vm3071, 0, %v3070
  %v3073 = vsub.s32 32, %v3072
  %v3074 = vshll.u32 %v3065, %v3072
  %v3075 = vshrl.u32 %v3057, %v3073
  %v3076 = vor.u32 %v3074, %v3075
  %v3077 = vsub.s32 4294967266, %v3072
  %v3078 = vadd.s32 %v3077, 127
  %v3079 = vshll.u32 %v3078, 23
  %v3080 = vor.u32 4788187, %v3079
  %v3081 = vand.u32 2147483647, %v3080
  %v3083 = vcvt.s32.f32 %v3076
  %v3084 = vmul.f32 %v3083, %v3081
  %v3085 = vxor.u32 %v3084, 2147483648
  %v3086 = vsel %vm3003, %v3085, %v3084
  %v3087 = vsub.s32 4, %v3063
  %v3088 = vsel %vm3003, %v3087, %v3063
  %v3089 = vsel %vm3002, %v504, %v3086
  %v3090 = vsel %vm3002, 0, %v3088
  %v3091 = vcosq.f32.pop %v3089
  %v3092 = vsinq.f32.pop %v3089
  %vm3093 = vweird.f32 %v504
  %v3094 = vadd.s32 %v3090, 3
  %v3095 = vand.u32 %v3094, 3
  %vm3096 = vcmp.lt.s32.totalorder %v3095, 2
  %vm3097 = vcmp.eq.s32.totalorder %v3095, 0
  %v3098 = vxor.u32 %v3092, 2147483648
  %v3099 = vsel %vm3097, %v3091, %v3098
  %vm3100 = vcmp.eq.s32.totalorder %v3095, 2
  %v3101 = vxor.u32 %v3091, 2147483648
  %v3102 = vsel %vm3100, %v3101, %v3092
  %v3103 = vsel %vm3096, %v3099, %v3102
  %v3104 = vsel %vm3093, nan, %v3103
  %vm3105 = vcmask 261120
  %3106 = vst.msk [vmem:[%s3] sm:$0xff] %vm3105, %v608
  %3107 = vst.msk [vmem:[%s3 + $0x8] sm:$0xff] %vm3105, %v712
  %3108 = vst.msk [vmem:[%s3 + $0x10] sm:$0xff] %vm3105, %v816
  %3109 = vst.msk [vmem:[%s3 + $0x18] sm:$0xff] %vm3105, %v920
  %3110 = vst.msk [vmem:[%s3 + $0x20] sm:$0xff] %vm3105, %v1024
  %3111 = vst.msk [vmem:[%s3 + $0x28] sm:$0xff] %vm3105, %v1128
  %3112 = vst.msk [vmem:[%s3 + $0x30] sm:$0xff] %vm3105, %v1232
  %3113 = vst.msk [vmem:[%s3 + $0x38] sm:$0xff] %vm3105, %v1336
  %3114 = vst.msk [vmem:[%s3 + $0x40] sm:$0xff] %vm3105, %v1440
  %3115 = vst.msk [vmem:[%s3 + $0x48] sm:$0xff] %vm3105, %v1544
  %3116 = vst.msk [vmem:[%s3 + $0x50] sm:$0xff] %vm3105, %v1648
  %3117 = vst.msk [vmem:[%s3 + $0x58] sm:$0xff] %vm3105, %v1752
  %3118 = vst.msk [vmem:[%s3 + $0x60] sm:$0xff] %vm3105, %v1856
  %3119 = vst.msk [vmem:[%s3 + $0x68] sm:$0xff] %vm3105, %v1960
  %3120 = vst.msk [vmem:[%s3 + $0x70] sm:$0xff] %vm3105, %v2064
  %3121 = vst.msk [vmem:[%s3 + $0x78] sm:$0xff] %vm3105, %v2168
  %3122 = vst.msk [vmem:[%s3 + $0x80] sm:$0xff] %vm3105, %v2272
  %3123 = vst.msk [vmem:[%s3 + $0x88] sm:$0xff] %vm3105, %v2376
  %3124 = vst.msk [vmem:[%s3 + $0x90] sm:$0xff] %vm3105, %v2480
  %3125 = vst.msk [vmem:[%s3 + $0x98] sm:$0xff] %vm3105, %v2584
  %3126 = vst.msk [vmem:[%s3 + $0xa0] sm:$0xff] %vm3105, %v2688
  %3127 = vst.msk [vmem:[%s3 + $0xa8] sm:$0xff] %vm3105, %v2792
  %3128 = vst.msk [vmem:[%s3 + $0xb0] sm:$0xff] %vm3105, %v2896
  %3129 = vst.msk [vmem:[%s3 + $0xb8] sm:$0xff] %vm3105, %v3000
  %3130 = vst.msk [vmem:[%s3 + $0xc0] sm:$0xff] %vm3105, %v3104
  // Predicated region
  $region14: #{tpu_custom_call.1} parent=0 // pred_check
    _
  $region15: #{tpu_custom_call.1} parent=0 // pred_check_branch
    %3132 = sbr.rel (0) target = $region17
  $region16: #{tpu_custom_call.1} parent=0 // pred_region
    _
  $region17: #{tpu_custom_call.1} parent=0 // pred_fallthru
    _
  // Predicated region
  $region18: #{tpu_custom_call.1} parent=0 // pred_check
    _
  $region19: #{tpu_custom_call.1} parent=0 // pred_check_branch
    %3134 = sbr.rel (0) target = $region21
  $region20: #{tpu_custom_call.1} parent=0 // pred_region
    _
  $region21: #{tpu_custom_call.1} parent=0 // pred_fallthru
    _

</llo_original>
